<compile_context>
chip_gen: v5e
topology: v5e:2x2
jax: 0.10.0
libtpu: 0.0.40
codegen_flags: <defaults>
</compile_context>

<pallas_src>
import functools
import jax
import jax.numpy as jnp
from jax.experimental import pallas as pl
from jax.experimental.pallas import tpu as pltpu

# Set True to feed bf16 operands to the MXU (f32 accumulation kept).  ~3x on
# v5e, ~2x on v6e/v7x; costs bit-exact f32 parity with PyTorch, so off by
# default.
USE_BF16_MXU = False


def _mxu(x):
    return x.astype(jnp.bfloat16 if USE_BF16_MXU else jnp.float32)


def _tpu_vmem_capacity():
    try:
        info = pltpu.get_tpu_info()
        cap = int(getattr(info, "vmem_capacity_bytes", 0))
        if cap > 0:
            return cap
    except Exception:
        pass
    return 64 * 1024 * 1024          # conservative (v7x-sized) fallback


_VMEM_CAP = _tpu_vmem_capacity()
# ~48 MiB scoped limit on v7x (64 MiB physical), ~96 MiB on v5e/v6e (128 MiB).
_VMEM_LIMIT = int(min(_VMEM_CAP * 3 // 4, 96 * 1024 * 1024))
_ROW_TILE_CAP = 1024 if _VMEM_CAP >= 96 * 1024 * 1024 else 512


def _cp(n_parallel):
    return pltpu.CompilerParams(
        dimension_semantics=("parallel",) * n_parallel,
        vmem_limit_bytes=_VMEM_LIMIT)


def _row_tile(M):
    # HBM-bound row kernels only reach ~85% of roofline at >=512-row tiles:
    # take the whole row range when it fits the generation-aware cap.
    return M if M <= _ROW_TILE_CAP else _ROW_TILE_CAP


def _q_tile(Lq):
    return Lq if Lq <= 512 else 256


# --------------------- fused LayerNorm -> Linear (+bias) ----------------------

def _ln_linear_kernel(x_ref, g_ref, b_ref, w_ref, wb_ref, o_ref, *, eps):
    x = x_ref[...].astype(jnp.float32)
    mean = jnp.mean(x, axis=-1, keepdims=True)
    xc = x - mean
    var = jnp.mean(xc * xc, axis=-1, keepdims=True)          # biased var (PyTorch LN)
    xn = (xc * jax.lax.rsqrt(var + eps) * g_ref[...].astype(jnp.float32)
          + b_ref[...].astype(jnp.float32))
    acc = jnp.dot(_mxu(xn), _mxu(w_ref[...]), preferred_element_type=jnp.float32)
    o_ref[...] = (acc + wb_ref[...].astype(jnp.float32)).astype(o_ref.dtype)


def ln_linear(x, g, b, w, wb, eps=1e-6):
    shape = x.shape
    K = shape[-1]
    N = w.shape[1]
    x2 = x.reshape(-1, K)
    M = x2.shape[0]
    TM = _row_tile(M)
    # TODO(synk): for production dims (K,N >= 768) add K/N tiling with an f32
    # VMEM accumulator (reduction axis last, "arbitrary") to fit v7x's 64 MiB.
    out = pl.pallas_call(
        functools.partial(_ln_linear_kernel, eps=eps),
        out_shape=jax.ShapeDtypeStruct((M, N), x.dtype),
        grid=(pl.cdiv(M, TM),),
        in_specs=[pl.BlockSpec((TM, K), lambda i: (i, 0)),
                  pl.BlockSpec((1, K), lambda i: (0, 0)),
                  pl.BlockSpec((1, K), lambda i: (0, 0)),
                  pl.BlockSpec((K, N), lambda i: (0, 0)),
                  pl.BlockSpec((1, N), lambda i: (0, 0))],
        out_specs=pl.BlockSpec((TM, N), lambda i: (i, 0)),
        compiler_params=_cp(1),
    )(x2, g.reshape(1, K), b.reshape(1, K), w, wb.reshape(1, N))
    return out.reshape(shape[:-1] + (N,))


# ---- fused LN -> {offset proj, attn-weight proj + segmented softmax} ---------

def _ln_dualproj_softmax_kernel(x_ref, g_ref, b_ref, wo_ref, bo_ref, wa_ref,
                                ba_ref, off_ref, aw_ref, *, eps, n_heads, seg):
    x = x_ref[...].astype(jnp.float32)
    mean = jnp.mean(x, axis=-1, keepdims=True)
    xc = x - mean
    var = jnp.mean(xc * xc, axis=-1, keepdims=True)
    xn = (xc * jax.lax.rsqrt(var + eps) * g_ref[...].astype(jnp.float32)
          + b_ref[...].astype(jnp.float32))
    # sampling-offset projection
    off = (jnp.dot(_mxu(xn), _mxu(wo_ref[...]), preferred_element_type=jnp.float32)
           + bo_ref[...].astype(jnp.float32))
    off_ref[...] = off.astype(off_ref.dtype)
    # attention-weight projection + single-pass segmented softmax: exp / max /
    # sum computed exactly once per (head, L*P) segment on narrow lane slices
    # (no n_heads full-width masked passes).
    z = (jnp.dot(_mxu(xn), _mxu(wa_ref[...]), preferred_element_type=jnp.float32)
         + ba_ref[...].astype(jnp.float32))
    heads = []
    for h in range(n_heads):
        zh = z[:, h * seg:(h + 1) * seg]
        zh = zh - jnp.max(zh, axis=-1, keepdims=True)
        e = jnp.exp(zh)
        heads.append(e / jnp.sum(e, axis=-1, keepdims=True))
    aw_ref[...] = jnp.concatenate(heads, axis=-1).astype(aw_ref.dtype)


def ln_dualproj_softmax(x, g, b, wo, bo, wa, ba, n_heads, seg, eps=1e-6):
    B, Lq, K = x.shape
    No = wo.shape[1]
    Na = wa.shape[1]
    x2 = x.reshape(-1, K)
    M = x2.shape[0]
    TM = _row_tile(M)
    off, aw = pl.pallas_call(
        functools.partial(_ln_dualproj_softmax_kernel, eps=eps,
                          n_heads=n_heads, seg=seg),
        out_shape=(jax.ShapeDtypeStruct((M, No), x.dtype),
                   jax.ShapeDtypeStruct((M, Na), x.dtype)),
        grid=(pl.cdiv(M, TM),),
        in_specs=[pl.BlockSpec((TM, K), lambda i: (i, 0)),
                  pl.BlockSpec((1, K), lambda i: (0, 0)),
                  pl.BlockSpec((1, K), lambda i: (0, 0)),
                  pl.BlockSpec((K, No), lambda i: (0, 0)),
                  pl.BlockSpec((1, No), lambda i: (0, 0)),
                  pl.BlockSpec((K, Na), lambda i: (0, 0)),
                  pl.BlockSpec((1, Na), lambda i: (0, 0))],
        out_specs=(pl.BlockSpec((TM, No), lambda i: (i, 0)),
                   pl.BlockSpec((TM, Na), lambda i: (i, 0))),
        compiler_params=_cp(1),
    )(x2, g.reshape(1, K), b.reshape(1, K), wo, bo.reshape(1, No),
      wa, ba.reshape(1, Na))
    return off.reshape(B, Lq, No), aw.reshape(B, Lq, Na)


# ------------------ fused Linear(+bias) -> [scale] -> +residual ---------------

def _linear_resid_kernel(x_ref, w_ref, b_ref, r_ref, o_ref):
    acc = (jnp.dot(_mxu(x_ref[...]), _mxu(w_ref[...]),
                   preferred_element_type=jnp.float32)
           + b_ref[...].astype(jnp.float32))
    o_ref[...] = (r_ref[...].astype(jnp.float32) + acc).astype(o_ref.dtype)


def _linear_resid_scale_kernel(x_ref, w_ref, b_ref, r_ref, s_ref, o_ref):
    acc = (jnp.dot(_mxu(x_ref[...]), _mxu(w_ref[...]),
                   preferred_element_type=jnp.float32)
           + b_ref[...].astype(jnp.float32))
    o_ref[...] = (r_ref[...].astype(jnp.float32)
                  + s_ref[...].astype(jnp.float32) * acc).astype(o_ref.dtype)


def linear_residual(x, w, b, resid, scale=None):
    out_shape = resid.shape
    K = x.shape[-1]
    N = w.shape[1]
    x2 = x.reshape(-1, K)
    r2 = resid.reshape(-1, N)
    M = x2.shape[0]
    TM = _row_tile(M)
    in_specs = [pl.BlockSpec((TM, K), lambda i: (i, 0)),
                pl.BlockSpec((K, N), lambda i: (0, 0)),
                pl.BlockSpec((1, N), lambda i: (0, 0)),
                pl.BlockSpec((TM, N), lambda i: (i, 0))]
    args = [x2, w, b.reshape(1, N), r2]
    kernel = _linear_resid_kernel
    if scale is not None:                     # gamma-scaled residual (Injector)
        in_specs.append(pl.BlockSpec((1, N), lambda i: (0, 0)))
        args.append(scale.reshape(1, N))
        kernel = _linear_resid_scale_kernel
    out = pl.pallas_call(
        kernel,
        out_shape=jax.ShapeDtypeStruct((M, N), resid.dtype),
        grid=(pl.cdiv(M, TM),),
        in_specs=in_specs,
        out_specs=pl.BlockSpec((TM, N), lambda i: (i, 0)),
        compiler_params=_cp(1),
    )(*args)
    return out.reshape(out_shape)


# ------------ depthwise 3x3 conv (+bias) with fused exact-erf GELU ------------

def _dwconv_gelu_kernel(x_ref, w_ref, b_ref, o_ref, *, H, W):
    # x_ref: (H+2, W+2, C) halo-padded NHWC image (one batch element)
    x = x_ref[...].astype(jnp.float32)
    w = w_ref[...].astype(jnp.float32)                     # (9, C)
    C = x.shape[-1]
    acc = jnp.zeros((H, W, C), jnp.float32)
    # TODO(synk): the dx=1,2 W-shifts are not sublane-aligned; use pltpu.roll
    # along the W axis (idle XLU slot) instead of relayout-copy slices.
    for dy in range(3):
        for dx in range(3):
            acc = acc + x[dy:dy + H, dx:dx + W, :] * w[dy * 3 + dx].reshape(1, 1, C)
    y = acc + b_ref[...].reshape(1, 1, C)
    # TODO(synk): offer tanh-approx GELU for v5e (1 EUP slot) if parity allows.
    y = 0.5 * y * (1.0 + jax.lax.erf(y * 0.7071067811865476))   # exact-erf GELU
    o_ref[...] = y.astype(o_ref.dtype)


def dwconv3x3_gelu(img, w9c, bias):
    # img: (B, H, W, C) channels-last; depthwise 3x3, stride 1, pad 1, bias, GELU.
    B, H, W, C = img.shape
    # TODO(synk): at production resolutions (v7x 64 MiB VMEM), tile over H with
    # in-kernel halo (overlapping row windows) and drop this host pad pass.
    xp = jnp.pad(img, ((0, 0), (1, 1), (1, 1), (0, 0)))
    return pl.pallas_call(
        functools.partial(_dwconv_gelu_kernel, H=H, W=W),
        out_shape=jax.ShapeDtypeStruct((B, H, W, C), img.dtype),
        grid=(B,),
        in_specs=[pl.BlockSpec((None, H + 2, W + 2, C), lambda b: (b, 0, 0, 0)),
                  pl.BlockSpec((9, C), lambda b: (0, 0)),
                  pl.BlockSpec((1, C), lambda b: (0, 0))],
        out_specs=pl.BlockSpec((None, H, W, C), lambda b: (b, 0, 0, 0)),
        compiler_params=_cp(1),
    )(xp, w9c, bias.reshape(1, C))


# ------- fully fused multi-scale deformable sampling (all heads & levels) -----

def _deform_attn_fused_kernel(v_ref, ref_ref, off_ref, aw_ref, o_ref, *,
                              spatial_shapes, level_starts, n_heads, n_points,
                              d_head):
    L = len(spatial_shapes)
    v = v_ref[...].astype(jnp.float32)              # (Lin, C) untransposed value
    ref = ref_ref[...].astype(jnp.float32)          # (TLq, 2)
    off = off_ref[...].astype(jnp.float32)          # (TLq, n_heads*L*P*2)
    aw = aw_ref[...].astype(jnp.float32)            # (TLq, n_heads*L*P), softmaxed
    TLq = ref.shape[0]
    refx = ref[:, 0:1]
    refy = ref[:, 1:2]
    head_outs = []
    for h in range(n_heads):
        v_h = v[:, h * d_head:(h + 1) * d_head]
        out_h = jnp.zeros((TLq, d_head), jnp.float32)
        for lvl, (H_, W_) in enumerate(spatial_shapes):
            s0 = level_starts[lvl]
            HW = H_ * W_
            v_hl = v_h[s0:s0 + HW, :]
            cols = jax.lax.broadcasted_iota(jnp.int32, (TLq, HW), 1)
            S = jnp.zeros((TLq, HW), jnp.float32)
            for pt in range(n_points):
                co = ((h * L + lvl) * n_points + pt) * 2
                ca = (h * L + lvl) * n_points + pt
                # grid_sample(align_corners=False) pixel coords:
                #   loc = ref + off/(W,H);  g = loc*(W,H) - 0.5 = ref*(W,H)+off-0.5
                gx = refx * W_ + off[:, co:co + 1] - 0.5
                gy = refy * H_ + off[:, co + 1:co + 2] - 0.5
                a = aw[:, ca:ca + 1]
                x0 = jnp.floor(gx)
                y0 = jnp.floor(gy)
                fx = gx - x0
                fy = gy - y0
                for (yi, xi, wgt) in ((y0, x0, (1 - fy) * (1 - fx)),
                                      (y0, x0 + 1.0, (1 - fy) * fx),
                                      (y0 + 1.0, x0, fy * (1 - fx)),
                                      (y0 + 1.0, x0 + 1.0, fy * fx)):
                    valid = (xi >= 0) & (xi <= W_ - 1) & (yi >= 0) & (yi <= H_ - 1)
                    xc = jnp.clip(xi, 0, W_ - 1).astype(jnp.int32)
                    yc = jnp.clip(yi, 0, H_ - 1).astype(jnp.int32)
                    idx = yc * W_ + xc
                    w_eff = jnp.where(valid, wgt, 0.0) * a   # zero padding * attn w
                    S = S + jnp.where(cols == idx, w_eff, 0.0)
            out_h = out_h + jnp.dot(_mxu(S), _mxu(v_hl),
                                    preferred_element_type=jnp.float32)
        head_outs.append(out_h)
    # lane-dense (full C) output store
    o_ref[...] = jnp.concatenate(head_outs, axis=-1).astype(o_ref.dtype)


def deform_sample_fused(value, ref, off, aw, spatial_shapes, n_heads, n_points):
    # value: (B, Lin, C) untransposed; ref: (1, Lq, 2); off/aw: (B, Lq, ...)
    B, Lin, C = value.shape
    Lq = off.shape[1]
    No = off.shape[2]
    Na = aw.shape[2]
    d_head = C // n_heads
    starts, s = [], 0
    for (H_, W_) in spatial_shapes:
        starts.append(s)
        s += H_ * W_
    assert s == Lin, "spatial_shapes must tile the value length"
    TLq = _q_tile(Lq)
    # TODO(synk): for production HW (>~2-4K per level) the dense (TLq, HW)
    # one-hot exceeds VMEM/vreg budgets; switch to a manual DMA-gather path
    # (PrefetchScalarGridSpec indices + make_async_copy) and tile HW with an
    # f32 VMEM accumulator on an "arbitrary" last grid axis.
    return pl.pallas_call(
        functools.partial(_deform_attn_fused_kernel,
                          spatial_shapes=tuple(spatial_shapes),
                          level_starts=tuple(starts),
                          n_heads=n_heads, n_points=n_points, d_head=d_head),
        out_shape=jax.ShapeDtypeStruct((B, Lq, C), value.dtype),
        grid=(B, pl.cdiv(Lq, TLq)),
        in_specs=[pl.BlockSpec((None, Lin, C), lambda b, q: (b, 0, 0)),
                  pl.BlockSpec((None, TLq, 2), lambda b, q: (0, q, 0)),
                  pl.BlockSpec((None, TLq, No), lambda b, q: (b, q, 0)),
                  pl.BlockSpec((None, TLq, Na), lambda b, q: (b, q, 0))],
        out_specs=pl.BlockSpec((None, TLq, C), lambda b, q: (b, q, 0)),
        compiler_params=_cp(2),
    )(value, ref, off, aw)


# ---------------------------- module-level glue --------------------------------

def ms_deform_attn_fused(query, reference_points, feat, spatial_shapes, p,
                         ln_q, ln_f, n_heads, n_points, residual, scale=None):
    """MSDeformAttn (ratio=1.0, no padding mask) with query_norm/feat_norm,
    projections+softmax, deformable sampling and output_proj + residual all in
    Pallas kernels."""
    B, Lq, C = query.shape
    L = len(spatial_shapes)

    # LN(feat) -> value projection (fused); stays (B, Lin, C) — the deform
    # kernel slices heads/levels internally (no host reshape/transpose/slice).
    value = ln_linear(feat, ln_f[0], ln_f[1], p['value_w'], p['value_b'])

    # LN(query) -> offsets & attention weights, per-head softmax fused; two
    # separate lane-dense outputs (no concat + masked split).
    off, aw = ln_dualproj_softmax(query, ln_q[0], ln_q[1],
                                  p['off_w'], p['off_b'], p['aw_w'], p['aw_b'],
                                  n_heads=n_heads, seg=L * n_points)

    # reference points: (1, Lq, 1, 2) -> (1, Lq, 2); level dim broadcasts.
    ref = reference_points.reshape(reference_points.shape[0], Lq, 2)

    # sampling-location math + bilinear gather + attention weighting + level
    # accumulation + head concat fused into one kernel, lane-dense over C.
    sampled = deform_sample_fused(value, ref, off, aw, spatial_shapes,
                                  n_heads=n_heads, n_points=n_points)

    # output projection + (optionally gamma-scaled) residual add (fused)
    return linear_residual(sampled, p['out_w'], p['out_b'], residual, scale)


def dwconv_gelu_module(x, w9c, bias, H, W):
    # DWConv.forward + GELU: split N=21n tokens into the 3 SPM pyramid levels,
    # depthwise-conv each (NHWC == PyTorch NCHW grouped conv), re-concat.
    B, N, C = x.shape
    n = N // 21
    assert N == 21 * n and 16 * n == 4 * H * W, "tokens must match 3-level pyramid"
    pieces = [(0, 16 * n, 2 * H, 2 * W),
              (16 * n, 20 * n, H, W),
              (20 * n, 21 * n, H // 2, W // 2)]
    outs = []
    for s, e, Hh, Ww in pieces:
        img = x[:, s:e, :].reshape(B, Hh, Ww, C)      # row-major tokens -> NHWC
        y = dwconv3x3_gelu(img, w9c, bias)
        outs.append(y.reshape(B, Hh * Ww, C))
    return jnp.concatenate(outs, axis=1)


def conv_ffn_fused(c, p, ffn_g, ffn_b, H, W):
    # Extractor FFN branch: c + fc2(GELU(dwconv(fc1(ffn_norm(c)))))   (drop=0)
    h = ln_linear(c, ffn_g, ffn_b, p['fc1_w'], p['fc1_b'])        # LN + fc1 fused
    h = dwconv_gelu_module(h, p['dw_w'], p['dw_b'], H, W)         # conv + GELU fused
    return linear_residual(h, p['fc2_w'], p['fc2_b'], c)          # fc2 + residual (no scale)


def interaction_block_forward(params, x, c, blocks, deform_inputs1, deform_inputs2,
                              H, W, num_heads, n_points):
    ref1, shapes1, _lsi1 = deform_inputs1   # level_start_index implied by static shapes
    ref2, shapes2, _lsi2 = deform_inputs2
    # ---- Injector (n_levels=3): x = x + gamma * attn(LN(x), LN(c)) ----
    pi = params['inj']
    x = ms_deform_attn_fused(x, ref1, c, shapes1, pi['attn'],
                             (pi['ln_q_g'], pi['ln_q_b']), (pi['ln_f_g'], pi['ln_f_b']),
                             num_heads, n_points, residual=x, scale=pi['gamma'])
    # ---- external ViT blocks ----
    for blk in blocks:
        x = blk(x, H, W)
    # ---- Extractor (n_levels=1, with_cffn=True) ----
    pe = params['ext']
    c = ms_deform_attn_fused(c, ref2, x, shapes2, pe['attn'],
                             (pe['ln_q_g'], pe['ln_q_b']), (pe['ln_f_g'], pe['ln_f_b']),
                             num_heads, n_points, residual=c, scale=None)
    c = conv_ffn_fused(c, pe['ffn'], pe['ffn_norm_g'], pe['ffn_norm_b'], H, W)
    return x, c


# ----------------------------- params / inputs --------------------------------

def init_interaction_block(key, dim, num_heads, n_points, cffn_ratio=0.25, init_values=0.5):
    keys = iter(jax.random.split(key, 64))

    def lin(fi, fo, scale=0.02):
        w = scale * jax.random.normal(next(keys), (fi, fo), jnp.float32)
        b = scale * jax.random.normal(next(keys), (fo,), jnp.float32)
        return w, b

    def attn(n_levels):
        vw, vb = lin(dim, dim)
        ow, ob = lin(dim, num_heads * n_levels * n_points * 2)
        aww, awb = lin(dim, num_heads * n_levels * n_points)
        pw, pb = lin(dim, dim)
        return dict(value_w=vw, value_b=vb, off_w=ow, off_b=ob,
                    aw_w=aww, aw_b=awb, out_w=pw, out_b=pb)

    hidden = int(dim * cffn_ratio)
    fc1_w, fc1_b = lin(dim, hidden)
    dw_w = 0.1 * jax.random.normal(next(keys), (9, hidden), jnp.float32)   # (3,3) taps flattened
    dw_b = 0.02 * jax.random.normal(next(keys), (hidden,), jnp.float32)
    fc2_w, fc2_b = lin(hidden, dim)
    ones = jnp.ones((dim,), jnp.float32)
    zeros = jnp.zeros((dim,), jnp.float32)
    return {
        'inj': {'ln_q_g': ones, 'ln_q_b': zeros, 'ln_f_g': ones, 'ln_f_b': zeros,
                'attn': attn(3), 'gamma': init_values * ones},
        'ext': {'ln_q_g': ones, 'ln_q_b': zeros, 'ln_f_g': ones, 'ln_f_b': zeros,
                'attn': attn(1), 'ffn_norm_g': ones, 'ffn_norm_b': zeros,
                'ffn': dict(fc1_w=fc1_w, fc1_b=fc1_b, dw_w=dw_w, dw_b=dw_b,
                            fc2_w=fc2_w, fc2_b=fc2_b)},
    }


def get_reference_points(spatial_shapes):
    refs = []
    for (H_, W_) in spatial_shapes:
        ry = (jnp.arange(H_, dtype=jnp.float32) + 0.5) / H_
        rx = (jnp.arange(W_, dtype=jnp.float32) + 0.5) / W_
        yy, xx = jnp.meshgrid(ry, rx, indexing='ij')
        refs.append(jnp.stack([xx.reshape(-1), yy.reshape(-1)], axis=-1))
    return jnp.concatenate(refs, axis=0)[None, :, None, :]   # (1, L_total, 1, 2)


def make_deform_inputs(H, W):
    shapes3 = ((2 * H, 2 * W), (H, W), (H // 2, W // 2))
    shapes1 = ((H, W),)
    lsi3 = jnp.array([0, 4 * H * W, 5 * H * W], jnp.int32)
    lsi1 = jnp.array([0], jnp.int32)
    deform_inputs1 = (get_reference_points(shapes1), shapes3, lsi3)   # injector: query=x, feat=c
    deform_inputs2 = (get_reference_points(shapes3), shapes1, lsi1)   # extractor: query=c, feat=x
    return deform_inputs1, deform_inputs2


# ----------------------------------- main --------------------------------------

if __name__ == "__main__":
    dim, num_heads, n_points = 32, 4, 4
    B, H, W = 2, 8, 8
    key = jax.random.PRNGKey(0)
    k_p, k_x, k_c = jax.random.split(key, 3)

    params = init_interaction_block(k_p, dim, num_heads, n_points)
    x = jax.random.normal(k_x, (B, H * W, dim), jnp.float32)                 # ViT tokens
    c = jax.random.normal(k_c, (B, 21 * (H * W) // 4, dim), jnp.float32)     # adapter pyramid tokens
    d1, d2 = make_deform_inputs(H, W)
    blocks = ()   # ViT `blocks` are external inputs to forward(); none for this test.

    x_out, c_out = interaction_block_forward(params, x, c, blocks, d1, d2, H, W,
                                             num_heads, n_points)
    jax.block_until_ready((x_out, c_out))
    assert x_out.shape == x.shape and c_out.shape == c.shape
    assert bool(jnp.all(jnp.isfinite(x_out))) and bool(jnp.all(jnp.isfinite(c_out)))
    print("KERNEL_OK")
</pallas_src>

<mosaic_0001>
module attributes {stable_mosaic.version = 11 : i64} {
  func.func @_ln_linear_kernel(%arg0: i32, %arg1: memref<512x32xf32, #tpu.memory_space<vmem>>, %arg2: memref<1x32xf32, #tpu.memory_space<vmem>>, %arg3: memref<1x32xf32, #tpu.memory_space<vmem>>, %arg4: memref<32x32xf32, #tpu.memory_space<vmem>>, %arg5: memref<1x32xf32, #tpu.memory_space<vmem>>, %arg6: memref<512x32xf32, #tpu.memory_space<vmem>>) attributes {dimension_semantics = [#tpu.dimension_semantics<parallel>], iteration_bounds = array<i64: 2>, scalar_prefetch = 0 : i64, scratch_operands = 0 : i64, tpu.core_type = #tpu.core_type<tc>, window_params = [{transform_indices = @transform_0, window_bounds = array<i64: 512, 32>}, {pipeline_mode = #tpu.pipeline_mode<synchronous>, transform_indices = @transform_1, window_bounds = array<i64: 1, 32>}, {pipeline_mode = #tpu.pipeline_mode<synchronous>, transform_indices = @transform_2, window_bounds = array<i64: 1, 32>}, {pipeline_mode = #tpu.pipeline_mode<synchronous>, transform_indices = @transform_3, window_bounds = array<i64: 32, 32>}, {pipeline_mode = #tpu.pipeline_mode<synchronous>, transform_indices = @transform_4, window_bounds = array<i64: 1, 32>}, {transform_indices = @transform_5, window_bounds = array<i64: 512, 32>}]} {
    %c0 = arith.constant 0 : index
    %c0_0 = arith.constant 0 : index
    %0 = vector.load %arg1[%c0, %c0_0] : memref<512x32xf32, #tpu.memory_space<vmem>>, vector<512x32xf32>
    %cst = arith.constant dense<0.000000e+00> : vector<512xf32>
    %1 = vector.multi_reduction <add>, %0, %cst [1] : vector<512x32xf32> to vector<512xf32>
    %2 = vector.shape_cast %1 : vector<512xf32> to vector<512x1xf32>
    %cst_1 = arith.constant 3.200000e+01 : f32
    %3 = vector.broadcast %cst_1 : f32 to vector<512x1xf32>
    %4 = arith.divf %2, %3 : vector<512x1xf32>
    %5 = vector.broadcast %4 : vector<512x1xf32> to vector<512x32xf32>
    %6 = arith.subf %0, %5 : vector<512x32xf32>
    %7 = arith.mulf %6, %6 : vector<512x32xf32>
    %cst_2 = arith.constant dense<0.000000e+00> : vector<512xf32>
    %8 = vector.multi_reduction <add>, %7, %cst_2 [1] : vector<512x32xf32> to vector<512xf32>
    %9 = vector.shape_cast %8 : vector<512xf32> to vector<512x1xf32>
    %cst_3 = arith.constant 3.200000e+01 : f32
    %10 = vector.broadcast %cst_3 : f32 to vector<512x1xf32>
    %11 = arith.divf %9, %10 : vector<512x1xf32>
    %cst_4 = arith.constant 9.99999997E-7 : f32
    %12 = vector.broadcast %cst_4 : f32 to vector<512x1xf32>
    %13 = arith.addf %11, %12 : vector<512x1xf32>
    %14 = math.rsqrt %13 : vector<512x1xf32>
    %15 = vector.broadcast %14 : vector<512x1xf32> to vector<512x32xf32>
    %16 = arith.mulf %6, %15 : vector<512x32xf32>
    %c0_5 = arith.constant 0 : index
    %c0_6 = arith.constant 0 : index
    %17 = vector.load %arg2[%c0_5, %c0_6] : memref<1x32xf32, #tpu.memory_space<vmem>>, vector<1x32xf32>
    %18 = vector.broadcast %17 : vector<1x32xf32> to vector<512x32xf32>
    %19 = arith.mulf %16, %18 : vector<512x32xf32>
    %c0_7 = arith.constant 0 : index
    %c0_8 = arith.constant 0 : index
    %20 = vector.load %arg3[%c0_7, %c0_8] : memref<1x32xf32, #tpu.memory_space<vmem>>, vector<1x32xf32>
    %21 = vector.broadcast %20 : vector<1x32xf32> to vector<512x32xf32>
    %22 = arith.addf %19, %21 : vector<512x32xf32>
    %c0_9 = arith.constant 0 : index
    %c0_10 = arith.constant 0 : index
    %23 = vector.load %arg4[%c0_9, %c0_10] : memref<32x32xf32, #tpu.memory_space<vmem>>, vector<32x32xf32>
    %cst_11 = arith.constant dense<0.000000e+00> : vector<512x32xf32>
    %24 = tpu.matmul %22, %23, %cst_11 {dimension_numbers = #tpu.dot_dimension_numbers<[1], [0], [0], [1], [0, 0, 1, 1], [], []>} : vector<512x32xf32>, vector<32x32xf32>, vector<512x32xf32> -> vector<512x32xf32>
    %c0_12 = arith.constant 0 : index
    %c0_13 = arith.constant 0 : index
    %25 = vector.load %arg5[%c0_12, %c0_13] : memref<1x32xf32, #tpu.memory_space<vmem>>, vector<1x32xf32>
    %26 = vector.broadcast %25 : vector<1x32xf32> to vector<512x32xf32>
    %27 = arith.addf %24, %26 : vector<512x32xf32>
    %c0_14 = arith.constant 0 : index
    %c0_15 = arith.constant 0 : index
    %28 = vector.load %arg6[%c0_14, %c0_15] : memref<512x32xf32, #tpu.memory_space<vmem>>, vector<512x32xf32>
    tpu.vector_store %arg6[%c0_14, %c0_15], %27 {strides = array<i32>} : memref<512x32xf32, #tpu.memory_space<vmem>>, vector<512x32xf32>,
    return
  }
  func.func @transform_0(%arg0: i32) -> (i32, i32) {
    %c0_i32 = arith.constant 0 : i32
    %c0_i32_0 = arith.constant 0 : i32
    return %arg0, %c0_i32 : i32, i32
  }
  func.func @transform_1(%arg0: i32) -> (i32, i32) {
    %c0_i32 = arith.constant 0 : i32
    %c0_i32_0 = arith.constant 0 : i32
    %c0_i32_1 = arith.constant 0 : i32
    return %c0_i32, %c0_i32_0 : i32, i32
  }
  func.func @transform_2(%arg0: i32) -> (i32, i32) {
    %c0_i32 = arith.constant 0 : i32
    %c0_i32_0 = arith.constant 0 : i32
    %c0_i32_1 = arith.constant 0 : i32
    return %c0_i32, %c0_i32_0 : i32, i32
  }
  func.func @transform_3(%arg0: i32) -> (i32, i32) {
    %c0_i32 = arith.constant 0 : i32
    %c0_i32_0 = arith.constant 0 : i32
    %c0_i32_1 = arith.constant 0 : i32
    return %c0_i32, %c0_i32_0 : i32, i32
  }
  func.func @transform_4(%arg0: i32) -> (i32, i32) {
    %c0_i32 = arith.constant 0 : i32
    %c0_i32_0 = arith.constant 0 : i32
    %c0_i32_1 = arith.constant 0 : i32
    return %c0_i32, %c0_i32_0 : i32, i32
  }
  func.func @transform_5(%arg0: i32) -> (i32, i32) {
    %c0_i32 = arith.constant 0 : i32
    %c0_i32_0 = arith.constant 0 : i32
    return %arg0, %c0_i32 : i32, i32
  }
}

</mosaic_0001>

<llo_original>
// kernel: tpu_custom_call.1
$region0: #{tpu_custom_call.1}
  #allocation0 [shape = 'u32[]', space=smem, size = 0x4, offset = 0x4, fixed_abs, tag = 'smem constant byte address 0x4 - core index']
  #allocation1 [shape = 'u32[72,128]{1,0:T(1,128)}', space=vmem, size = 0x9000, scoped, tag = 'internal scratch']
  %s0 = inlined_call_operand.vmem [shape: f32[672,32], index: 0, kind: input, shape index: {}]
  %s1 = inlined_call_operand.vmem [shape: f32[1,32], index: 1, kind: input, shape index: {}]
  %s2 = inlined_call_operand.vmem [shape: f32[1,32], index: 2, kind: input, shape index: {}]
  %s3 = inlined_call_operand.vmem [shape: f32[32,32], index: 3, kind: input, shape index: {}]
  %s4 = inlined_call_operand.vmem [shape: f32[1,32], index: 4, kind: input, shape index: {}]
  %s5 = inlined_call_operand.vmem [shape: f32[672,32], index: 5, kind: output, shape index: {}]
  %s6 = sld [smem:[#allocation0]]
  $region101: #{tpu_custom_call.1} parent=0
    _
  %s8 = ssub.s32 1, %s6
  %s9 = scalar_select 0, %s8, %s6
  $region1: #{tpu_custom_call.1} parent=0
    #allocation2 [shape = 'u8[524288]{0}', space=vmem, size = 0x80000, scoped, tag = 'output window, operand 0']
    loop: start=0, step=1, limit=4
    $region2: #{tpu_custom_call.1} parent=1 // loop_pre_header
      _
    $region3: #{tpu_custom_call.1} parent=1 // loop_header
      %s11 = sphi 0, %s15
      %p12 = scmp.ge.s32.totalorder %s11, 4
      %s21 = sphi 0, %s23
      %s24 = sphi 0, %s21
      %s25 = sphi 0, %s24
      %s41 = sphi 0, %s25
      %s45 = sphi 0, %s45
      %s47 = sphi 0, %s45
      %s48 = sphi 0, %s47
      %s62 = sphi 0, %s48
      %s66 = sphi 0, %s66
      %s68 = sphi 0, %s66
      %s69 = sphi 0, %s68
      %s83 = sphi 0, %s69
      %s87 = sphi 0, %s87
      %s89 = sphi 0, %s87
      %s90 = sphi 0, %s89
      %s104 = sphi 0, %s90
      %s108 = sphi 0, %s108
      %s110 = sphi 0, %s108
      %s111 = sphi 0, %s110
      %s125 = sphi 0, %s111
      %s131 = sphi 0, %s133
      %s134 = sphi 0, %s131
      %s135 = sphi 0, %s134
      %s151 = sphi 0, %s135
    $region4: #{tpu_custom_call.1} parent=1 // loop_header_branch
      %14 = sbr.rel (%p12) target = $region8
    $region5: #{tpu_custom_call.1} parent=1 // loop_body
      %s16 = ssub.s32 %s11, 1
      %s17 = ssub.s32 %s11, 2
      %s18 = sadd.s32 %s11, 1
      %s19 = ssub.s32 %s11, %s18
      %p20 = scmp.eq.s32.totalorder %s19, 0
      %s22 = sadd.s32 %s21, 1
      %s23 = scalar_select %p20, %s21, %s22
      %p26 = pneg %p20
      %p27 = scmp.eq.s32.totalorder %s11, 1
      %p28 = por %p26, %p27
      %p29 = scmp.ne.s32.totalorder %s21, %s24
      %p30 = scmp.eq.s32.totalorder %s11, 0
      %p31 = por %p29, %p30
      %p32 = scmp.ne.s32.totalorder %s21, %s24
      %p33 = scmp.eq.s32.totalorder %s16, 1
      %p34 = por %p32, %p33
      %p35 = scmp.ne.s32.totalorder %s24, %s25
      %p36 = scmp.eq.s32.totalorder %s16, 0
      %p37 = por %p35, %p36
      %p38 = scmp.ne.s32.totalorder %s24, %s25
      %p39 = scmp.eq.s32.totalorder %s17, 1
      %p40 = por %p38, %p39
      %p42 = scmp.ne.s32.totalorder %s25, %s41
      %p43 = scmp.eq.s32.totalorder %s17, 0
      %p44 = por %p42, %p43
      %s46 = sadd.s32 %s45, 1
      %p49 = scmp.eq.s32.totalorder %s11, 1
      %p50 = scmp.ne.s32.totalorder %s45, %s47
      %p51 = scmp.eq.s32.totalorder %s11, 0
      %p52 = por %p50, %p51
      %p53 = scmp.ne.s32.totalorder %s45, %s47
      %p54 = scmp.eq.s32.totalorder %s16, 1
      %p55 = por %p53, %p54
      %p56 = scmp.ne.s32.totalorder %s47, %s48
      %p57 = scmp.eq.s32.totalorder %s16, 0
      %p58 = por %p56, %p57
      %p59 = scmp.ne.s32.totalorder %s47, %s48
      %p60 = scmp.eq.s32.totalorder %s17, 1
      %p61 = por %p59, %p60
      %p63 = scmp.ne.s32.totalorder %s48, %s62
      %p64 = scmp.eq.s32.totalorder %s17, 0
      %p65 = por %p63, %p64
      %s67 = sadd.s32 %s66, 1
      %p70 = scmp.eq.s32.totalorder %s11, 1
      %p71 = scmp.ne.s32.totalorder %s66, %s68
      %p72 = scmp.eq.s32.totalorder %s11, 0
      %p73 = por %p71, %p72
      %p74 = scmp.ne.s32.totalorder %s66, %s68
      %p75 = scmp.eq.s32.totalorder %s16, 1
      %p76 = por %p74, %p75
      %p77 = scmp.ne.s32.totalorder %s68, %s69
      %p78 = scmp.eq.s32.totalorder %s16, 0
      %p79 = por %p77, %p78
      %p80 = scmp.ne.s32.totalorder %s68, %s69
      %p81 = scmp.eq.s32.totalorder %s17, 1
      %p82 = por %p80, %p81
      %p84 = scmp.ne.s32.totalorder %s69, %s83
      %p85 = scmp.eq.s32.totalorder %s17, 0
      %p86 = por %p84, %p85
      %s88 = sadd.s32 %s87, 1
      %p91 = scmp.eq.s32.totalorder %s11, 1
      %p92 = scmp.ne.s32.totalorder %s87, %s89
      %p93 = scmp.eq.s32.totalorder %s11, 0
      %p94 = por %p92, %p93
      %p95 = scmp.ne.s32.totalorder %s87, %s89
      %p96 = scmp.eq.s32.totalorder %s16, 1
      %p97 = por %p95, %p96
      %p98 = scmp.ne.s32.totalorder %s89, %s90
      %p99 = scmp.eq.s32.totalorder %s16, 0
      %p100 = por %p98, %p99
      %p101 = scmp.ne.s32.totalorder %s89, %s90
      %p102 = scmp.eq.s32.totalorder %s17, 1
      %p103 = por %p101, %p102
      %p105 = scmp.ne.s32.totalorder %s90, %s104
      %p106 = scmp.eq.s32.totalorder %s17, 0
      %p107 = por %p105, %p106
      %s109 = sadd.s32 %s108, 1
      %p112 = scmp.eq.s32.totalorder %s11, 1
      %p113 = scmp.ne.s32.totalorder %s108, %s110
      %p114 = scmp.eq.s32.totalorder %s11, 0
      %p115 = por %p113, %p114
      %p116 = scmp.ne.s32.totalorder %s108, %s110
      %p117 = scmp.eq.s32.totalorder %s16, 1
      %p118 = por %p116, %p117
      %p119 = scmp.ne.s32.totalorder %s110, %s111
      %p120 = scmp.eq.s32.totalorder %s16, 0
      %p121 = por %p119, %p120
      %p122 = scmp.ne.s32.totalorder %s110, %s111
      %p123 = scmp.eq.s32.totalorder %s17, 1
      %p124 = por %p122, %p123
      %p126 = scmp.ne.s32.totalorder %s111, %s125
      %p127 = scmp.eq.s32.totalorder %s17, 0
      %p128 = por %p126, %p127
      %s129 = ssub.s32 %s11, %s18
      %p130 = scmp.eq.s32.totalorder %s129, 0
      %s132 = sadd.s32 %s131, 1
      %s133 = scalar_select %p130, %s131, %s132
      %p136 = pneg %p130
      %p137 = scmp.eq.s32.totalorder %s11, 1
      %p138 = por %p136, %p137
      %p139 = scmp.ne.s32.totalorder %s131, %s134
      %p140 = scmp.eq.s32.totalorder %s11, 0
      %p141 = por %p139, %p140
      %p142 = scmp.ne.s32.totalorder %s131, %s134
      %p143 = scmp.eq.s32.totalorder %s16, 1
      %p144 = por %p142, %p143
      %p145 = scmp.ne.s32.totalorder %s134, %s135
      %p146 = scmp.eq.s32.totalorder %s16, 0
      %p147 = por %p145, %p146
      %p148 = scmp.ne.s32.totalorder %s134, %s135
      %p149 = scmp.eq.s32.totalorder %s17, 1
      %p150 = por %p148, %p149
      %p152 = scmp.ne.s32.totalorder %s135, %s151
      %p153 = scmp.eq.s32.totalorder %s17, 0
      %p154 = por %p152, %p153
      %p155 = scmp.le.s32.totalorder 1, %s11
      %p156 = scmp.lt.s32.totalorder %s11, 3
      %p157 = pnand %p155, %p156
      %p158 = pneg %p157
      // Predicated region
      $region9: #{tpu_custom_call.1} parent=5 // pred_check
        _
      $region10: #{tpu_custom_call.1} parent=5 // pred_check_branch
        %160 = sbr.rel (%p157) target = $region12
      $region11: #{tpu_custom_call.1} parent=5 // pred_region
        %s161 = ssub.s32 %s11, 1
        // Predicated region
        $region13: #{tpu_custom_call.1} parent=11 // pred_check
          %p162 = pneg %p58
        $region14: #{tpu_custom_call.1} parent=11 // pred_check_branch
          %164 = sbr.rel (%p162) target = $region16
        $region15: #{tpu_custom_call.1} parent=11 // pred_region
          _
        $region16: #{tpu_custom_call.1} parent=11 // pred_fallthru
          _
        // Predicated region
        $region17: #{tpu_custom_call.1} parent=11 // pred_check
          %p165 = pneg %p79
        $region18: #{tpu_custom_call.1} parent=11 // pred_check_branch
          %167 = sbr.rel (%p165) target = $region20
        $region19: #{tpu_custom_call.1} parent=11 // pred_region
          _
        $region20: #{tpu_custom_call.1} parent=11 // pred_fallthru
          _
        // Predicated region
        $region21: #{tpu_custom_call.1} parent=11 // pred_check
          %p168 = pneg %p100
        $region22: #{tpu_custom_call.1} parent=11 // pred_check_branch
          %170 = sbr.rel (%p168) target = $region24
        $region23: #{tpu_custom_call.1} parent=11 // pred_region
          _
        $region24: #{tpu_custom_call.1} parent=11 // pred_fallthru
          _
        // Predicated region
        $region25: #{tpu_custom_call.1} parent=11 // pred_check
          %p171 = pneg %p121
        $region26: #{tpu_custom_call.1} parent=11 // pred_check_branch
          %173 = sbr.rel (%p171) target = $region28
        $region27: #{tpu_custom_call.1} parent=11 // pred_region
          _
        $region28: #{tpu_custom_call.1} parent=11 // pred_fallthru
          _
      $region12: #{tpu_custom_call.1} parent=5 // pred_fallthru
        _
      %p174 = scmp.lt.s32.totalorder %s11, 2
      // Predicated region
      $region29: #{tpu_custom_call.1} parent=5 // pred_check
        %p175 = pneg %p174
      $region30: #{tpu_custom_call.1} parent=5 // pred_check_branch
        %177 = sbr.rel (%p175) target = $region32
      $region31: #{tpu_custom_call.1} parent=5 // pred_region
        // Predicated region
        $region33: #{tpu_custom_call.1} parent=31 // pred_check
          %p178 = pneg %p31
        $region34: #{tpu_custom_call.1} parent=31 // pred_check_branch
          %180 = sbr.rel (%p178) target = $region36
        $region35: #{tpu_custom_call.1} parent=31 // pred_region
          %s181 = smul.u32 64, %s11
          %s182 = ssub.s32 84, %s181
          %p183 = scmp.lt.s32.totalorder %s182, 64
          %s184 = scalar_select %p183, %s182, 64
          %s185 = smul.u32 8, %s184
          %p186 = scmp.lt.s32.totalorder %s181, 83
          %s187 = scalar_select %p186, %s181, 83
          %s188 = smul.addr %s187, 8
          %s189 = scalar_lea.vmem %s0, %s188
          %s190 = smul.u32 64, %s11
          %s191 = ssub.s32 84, %s190
          %p192 = scmp.lt.s32.totalorder %s191, 64
          %s193 = scalar_select %p192, %s191, 64
          %s194 = smul.u32 8, %s193
        $region36: #{tpu_custom_call.1} parent=31 // pred_fallthru
          _
      $region32: #{tpu_custom_call.1} parent=5 // pred_fallthru
        _
      %p195 = scmp.le.s32.totalorder 1, %s11
      %p196 = scmp.lt.s32.totalorder %s11, 3
      %p197 = pnand %p195, %p196
      %p198 = pneg %p197
      // Predicated region
      $region37: #{tpu_custom_call.1} parent=5 // pred_check
        _
      $region38: #{tpu_custom_call.1} parent=5 // pred_check_branch
        %200 = sbr.rel (%p197) target = $region40
      $region39: #{tpu_custom_call.1} parent=5 // pred_region
        %s201 = ssub.s32 %s11, 1
        %s202 = smul.u32 64, %s16
        %s203 = ssub.s32 84, %s202
        %p204 = scmp.lt.s32.totalorder %s203, 64
        %s205 = scalar_select %p204, %s203, 64
        %s206 = smul.u32 8, %s205
        %p207 = scmp.lt.s32.totalorder %s202, 83
        %s208 = scalar_select %p207, %s202, 83
        %s209 = smul.addr %s208, 8
        %s210 = scalar_lea.vmem %s0, %s209
        %p211 = pneg %p37
        %p212 = pneg %p34
        %p213 = pneg %p58
        %p214 = pneg %p55
        %p215 = pneg %p79
        %p216 = pneg %p76
        %p217 = pneg %p100
        %p218 = pneg %p97
        %p219 = pneg %p121
        %p220 = pneg %p118
        %p221 = pneg %p147
        %p222 = pneg %p144
        %s223 = sand.u32 %s134, 1
        %s224 = sand.u32 %s134, 1
        %s225 = smul.addr %s224, 512
        %s226 = scalar_lea.vmem [#allocation2], %s225
        %s227 = smul.u32 64, %s16
        %s228 = ssub.s32 84, %s227
        %p229 = scmp.lt.s32.totalorder %s228, 64
        %s230 = scalar_select %p229, %s228, 64
        %s231 = smul.u32 8, %s230
        %p232 = scmp.lt.s32.totalorder %s227, 83
        %s233 = scalar_select %p232, %s227, 83
        %s234 = smul.addr %s233, 8
        %s235 = scalar_lea.vmem %s0, %s234
        %s236 = smul.u32 64, %s16
        %s237 = ssub.s32 84, %s236
        %p238 = scmp.lt.s32.totalorder %s237, 64
        %s239 = scalar_select %p238, %s237, 64
        %s240 = smul.u32 8, %s239
        %s241 = smul.u32 64, %s16
        %s242 = ssub.s32 84, %s241
        %p243 = scmp.lt.s32.totalorder %s242, 64
        %s244 = scalar_select %p243, %s242, 64
        %s245 = smul.u32 8, %s244
        %v246 = vld [vmem:[%s235] sm:$0xff]
        %v247 = vld [vmem:[%s235 + $0x8] sm:$0xff]
        %v248 = vld [vmem:[%s235 + $0x10] sm:$0xff]
        %v249 = vld [vmem:[%s235 + $0x18] sm:$0xff]
        %v250 = vld [vmem:[%s235 + $0x20] sm:$0xff]
        %v251 = vld [vmem:[%s235 + $0x28] sm:$0xff]
        %v252 = vld [vmem:[%s235 + $0x30] sm:$0xff]
        %v253 = vld [vmem:[%s235 + $0x38] sm:$0xff]
        %v254 = vld [vmem:[%s235 + $0x40] sm:$0xff]
        %v255 = vld [vmem:[%s235 + $0x48] sm:$0xff]
        %v256 = vld [vmem:[%s235 + $0x50] sm:$0xff]
        %v257 = vld [vmem:[%s235 + $0x58] sm:$0xff]
        %v258 = vld [vmem:[%s235 + $0x60] sm:$0xff]
        %v259 = vld [vmem:[%s235 + $0x68] sm:$0xff]
        %v260 = vld [vmem:[%s235 + $0x70] sm:$0xff]
        %v261 = vld [vmem:[%s235 + $0x78] sm:$0xff]
        %v262 = vld [vmem:[%s235 + $0x80] sm:$0xff]
        %v263 = vld [vmem:[%s235 + $0x88] sm:$0xff]
        %v264 = vld [vmem:[%s235 + $0x90] sm:$0xff]
        %v265 = vld [vmem:[%s235 + $0x98] sm:$0xff]
        %v266 = vld [vmem:[%s235 + $0xa0] sm:$0xff]
        %v267 = vld [vmem:[%s235 + $0xa8] sm:$0xff]
        %v268 = vld [vmem:[%s235 + $0xb0] sm:$0xff]
        %v269 = vld [vmem:[%s235 + $0xb8] sm:$0xff]
        %v270 = vld [vmem:[%s235 + $0xc0] sm:$0xff]
        %v271 = vld [vmem:[%s235 + $0xc8] sm:$0xff]
        %v272 = vld [vmem:[%s235 + $0xd0] sm:$0xff]
        %v273 = vld [vmem:[%s235 + $0xd8] sm:$0xff]
        %v274 = vld [vmem:[%s235 + $0xe0] sm:$0xff]
        %v275 = vld [vmem:[%s235 + $0xe8] sm:$0xff]
        %v276 = vld [vmem:[%s235 + $0xf0] sm:$0xff]
        %v277 = vld [vmem:[%s235 + $0xf8] sm:$0xff]
        %v278 = vld [vmem:[%s235 + $0x100] sm:$0xff]
        %v279 = vld [vmem:[%s235 + $0x108] sm:$0xff]
        %v280 = vld [vmem:[%s235 + $0x110] sm:$0xff]
        %v281 = vld [vmem:[%s235 + $0x118] sm:$0xff]
        %v282 = vld [vmem:[%s235 + $0x120] sm:$0xff]
        %v283 = vld [vmem:[%s235 + $0x128] sm:$0xff]
        %v284 = vld [vmem:[%s235 + $0x130] sm:$0xff]
        %v285 = vld [vmem:[%s235 + $0x138] sm:$0xff]
        %v286 = vld [vmem:[%s235 + $0x140] sm:$0xff]
        %v287 = vld [vmem:[%s235 + $0x148] sm:$0xff]
        %v288 = vld [vmem:[%s235 + $0x150] sm:$0xff]
        %v289 = vld [vmem:[%s235 + $0x158] sm:$0xff]
        %v290 = vld [vmem:[%s235 + $0x160] sm:$0xff]
        %v291 = vld [vmem:[%s235 + $0x168] sm:$0xff]
        %v292 = vld [vmem:[%s235 + $0x170] sm:$0xff]
        %v293 = vld [vmem:[%s235 + $0x178] sm:$0xff]
        %v294 = vld [vmem:[%s235 + $0x180] sm:$0xff]
        %v295 = vld [vmem:[%s235 + $0x188] sm:$0xff]
        %v296 = vld [vmem:[%s235 + $0x190] sm:$0xff]
        %v297 = vld [vmem:[%s235 + $0x198] sm:$0xff]
        %v298 = vld [vmem:[%s235 + $0x1a0] sm:$0xff]
        %v299 = vld [vmem:[%s235 + $0x1a8] sm:$0xff]
        %v300 = vld [vmem:[%s235 + $0x1b0] sm:$0xff]
        %v301 = vld [vmem:[%s235 + $0x1b8] sm:$0xff]
        %v302 = vld [vmem:[%s235 + $0x1c0] sm:$0xff]
        %v303 = vld [vmem:[%s235 + $0x1c8] sm:$0xff]
        %v304 = vld [vmem:[%s235 + $0x1d0] sm:$0xff]
        %v305 = vld [vmem:[%s235 + $0x1d8] sm:$0xff]
        %v306 = vld [vmem:[%s235 + $0x1e0] sm:$0xff]
        %v307 = vld [vmem:[%s235 + $0x1e8] sm:$0xff]
        %v308 = vld [vmem:[%s235 + $0x1f0] sm:$0xff]
        %v309 = vld [vmem:[%s235 + $0x1f8] sm:$0xff]
        %vm310 = vcmask 261120
        %v311 = vsel %vm310, %v246, 0.0
        %312 = vadd.xlane.f32.xlu0 %v311
        %v313 = vpop.xlane.xlu0 %312
        %v314 = vsel %vm310, %v247, 0.0
        %315 = vadd.xlane.f32.xlu0 %v314
        %v316 = vpop.xlane.xlu0 %315
        %v317 = vsel %vm310, %v248, 0.0
        %318 = vadd.xlane.f32.xlu0 %v317
        %v319 = vpop.xlane.xlu0 %318
        %v320 = vsel %vm310, %v249, 0.0
        %321 = vadd.xlane.f32.xlu0 %v320
        %v322 = vpop.xlane.xlu0 %321
        %v323 = vsel %vm310, %v250, 0.0
        %324 = vadd.xlane.f32.xlu0 %v323
        %v325 = vpop.xlane.xlu0 %324
        %v326 = vsel %vm310, %v251, 0.0
        %327 = vadd.xlane.f32.xlu0 %v326
        %v328 = vpop.xlane.xlu0 %327
        %v329 = vsel %vm310, %v252, 0.0
        %330 = vadd.xlane.f32.xlu0 %v329
        %v331 = vpop.xlane.xlu0 %330
        %v332 = vsel %vm310, %v253, 0.0
        %333 = vadd.xlane.f32.xlu0 %v332
        %v334 = vpop.xlane.xlu0 %333
        %v335 = vsel %vm310, %v254, 0.0
        %336 = vadd.xlane.f32.xlu0 %v335
        %v337 = vpop.xlane.xlu0 %336
        %v338 = vsel %vm310, %v255, 0.0
        %339 = vadd.xlane.f32.xlu0 %v338
        %v340 = vpop.xlane.xlu0 %339
        %v341 = vsel %vm310, %v256, 0.0
        %342 = vadd.xlane.f32.xlu0 %v341
        %v343 = vpop.xlane.xlu0 %342
        %v344 = vsel %vm310, %v257, 0.0
        %345 = vadd.xlane.f32.xlu0 %v344
        %v346 = vpop.xlane.xlu0 %345
        %v347 = vsel %vm310, %v258, 0.0
        %348 = vadd.xlane.f32.xlu0 %v347
        %v349 = vpop.xlane.xlu0 %348
        %v350 = vsel %vm310, %v259, 0.0
        %351 = vadd.xlane.f32.xlu0 %v350
        %v352 = vpop.xlane.xlu0 %351
        %v353 = vsel %vm310, %v260, 0.0
        %354 = vadd.xlane.f32.xlu0 %v353
        %v355 = vpop.xlane.xlu0 %354
        %v356 = vsel %vm310, %v261, 0.0
        %357 = vadd.xlane.f32.xlu0 %v356
        %v358 = vpop.xlane.xlu0 %357
        %v359 = vsel %vm310, %v262, 0.0
        %360 = vadd.xlane.f32.xlu0 %v359
        %v361 = vpop.xlane.xlu0 %360
        %v362 = vsel %vm310, %v263, 0.0
        %363 = vadd.xlane.f32.xlu0 %v362
        %v364 = vpop.xlane.xlu0 %363
        %v365 = vsel %vm310, %v264, 0.0
        %366 = vadd.xlane.f32.xlu0 %v365
        %v367 = vpop.xlane.xlu0 %366
        %v368 = vsel %vm310, %v265, 0.0
        %369 = vadd.xlane.f32.xlu0 %v368
        %v370 = vpop.xlane.xlu0 %369
        %v371 = vsel %vm310, %v266, 0.0
        %372 = vadd.xlane.f32.xlu0 %v371
        %v373 = vpop.xlane.xlu0 %372
        %v374 = vsel %vm310, %v267, 0.0
        %375 = vadd.xlane.f32.xlu0 %v374
        %v376 = vpop.xlane.xlu0 %375
        %v377 = vsel %vm310, %v268, 0.0
        %378 = vadd.xlane.f32.xlu0 %v377
        %v379 = vpop.xlane.xlu0 %378
        %v380 = vsel %vm310, %v269, 0.0
        %381 = vadd.xlane.f32.xlu0 %v380
        %v382 = vpop.xlane.xlu0 %381
        %v383 = vsel %vm310, %v270, 0.0
        %384 = vadd.xlane.f32.xlu0 %v383
        %v385 = vpop.xlane.xlu0 %384
        %v386 = vsel %vm310, %v271, 0.0
        %387 = vadd.xlane.f32.xlu0 %v386
        %v388 = vpop.xlane.xlu0 %387
        %v389 = vsel %vm310, %v272, 0.0
        %390 = vadd.xlane.f32.xlu0 %v389
        %v391 = vpop.xlane.xlu0 %390
        %v392 = vsel %vm310, %v273, 0.0
        %393 = vadd.xlane.f32.xlu0 %v392
        %v394 = vpop.xlane.xlu0 %393
        %v395 = vsel %vm310, %v274, 0.0
        %396 = vadd.xlane.f32.xlu0 %v395
        %v397 = vpop.xlane.xlu0 %396
        %v398 = vsel %vm310, %v275, 0.0
        %399 = vadd.xlane.f32.xlu0 %v398
        %v400 = vpop.xlane.xlu0 %399
        %v401 = vsel %vm310, %v276, 0.0
        %402 = vadd.xlane.f32.xlu0 %v401
        %v403 = vpop.xlane.xlu0 %402
        %v404 = vsel %vm310, %v277, 0.0
        %405 = vadd.xlane.f32.xlu0 %v404
        %v406 = vpop.xlane.xlu0 %405
        %v407 = vsel %vm310, %v278, 0.0
        %408 = vadd.xlane.f32.xlu0 %v407
        %v409 = vpop.xlane.xlu0 %408
        %v410 = vsel %vm310, %v279, 0.0
        %411 = vadd.xlane.f32.xlu0 %v410
        %v412 = vpop.xlane.xlu0 %411
        %v413 = vsel %vm310, %v280, 0.0
        %414 = vadd.xlane.f32.xlu0 %v413
        %v415 = vpop.xlane.xlu0 %414
        %v416 = vsel %vm310, %v281, 0.0
        %417 = vadd.xlane.f32.xlu0 %v416
        %v418 = vpop.xlane.xlu0 %417
        %v419 = vsel %vm310, %v282, 0.0
        %420 = vadd.xlane.f32.xlu0 %v419
        %v421 = vpop.xlane.xlu0 %420
        %v422 = vsel %vm310, %v283, 0.0
        %423 = vadd.xlane.f32.xlu0 %v422
        %v424 = vpop.xlane.xlu0 %423
        %v425 = vsel %vm310, %v284, 0.0
        %426 = vadd.xlane.f32.xlu0 %v425
        %v427 = vpop.xlane.xlu0 %426
        %v428 = vsel %vm310, %v285, 0.0
        %429 = vadd.xlane.f32.xlu0 %v428
        %v430 = vpop.xlane.xlu0 %429
        %v431 = vsel %vm310, %v286, 0.0
        %432 = vadd.xlane.f32.xlu0 %v431
        %v433 = vpop.xlane.xlu0 %432
        %v434 = vsel %vm310, %v287, 0.0
        %435 = vadd.xlane.f32.xlu0 %v434
        %v436 = vpop.xlane.xlu0 %435
        %v437 = vsel %vm310, %v288, 0.0
        %438 = vadd.xlane.f32.xlu0 %v437
        %v439 = vpop.xlane.xlu0 %438
        %v440 = vsel %vm310, %v289, 0.0
        %441 = vadd.xlane.f32.xlu0 %v440
        %v442 = vpop.xlane.xlu0 %441
        %v443 = vsel %vm310, %v290, 0.0
        %444 = vadd.xlane.f32.xlu0 %v443
        %v445 = vpop.xlane.xlu0 %444
        %v446 = vsel %vm310, %v291, 0.0
        %447 = vadd.xlane.f32.xlu0 %v446
        %v448 = vpop.xlane.xlu0 %447
        %v449 = vsel %vm310, %v292, 0.0
        %450 = vadd.xlane.f32.xlu0 %v449
        %v451 = vpop.xlane.xlu0 %450
        %v452 = vsel %vm310, %v293, 0.0
        %453 = vadd.xlane.f32.xlu0 %v452
        %v454 = vpop.xlane.xlu0 %453
        %v455 = vsel %vm310, %v294, 0.0
        %456 = vadd.xlane.f32.xlu0 %v455
        %v457 = vpop.xlane.xlu0 %456
        %v458 = vsel %vm310, %v295, 0.0
        %459 = vadd.xlane.f32.xlu0 %v458
        %v460 = vpop.xlane.xlu0 %459
        %v461 = vsel %vm310, %v296, 0.0
        %462 = vadd.xlane.f32.xlu0 %v461
        %v463 = vpop.xlane.xlu0 %462
        %v464 = vsel %vm310, %v297, 0.0
        %465 = vadd.xlane.f32.xlu0 %v464
        %v466 = vpop.xlane.xlu0 %465
        %v467 = vsel %vm310, %v298, 0.0
        %468 = vadd.xlane.f32.xlu0 %v467
        %v469 = vpop.xlane.xlu0 %468
        %v470 = vsel %vm310, %v299, 0.0
        %471 = vadd.xlane.f32.xlu0 %v470
        %v472 = vpop.xlane.xlu0 %471
        %v473 = vsel %vm310, %v300, 0.0
        %474 = vadd.xlane.f32.xlu0 %v473
        %v475 = vpop.xlane.xlu0 %474
        %v476 = vsel %vm310, %v301, 0.0
        %477 = vadd.xlane.f32.xlu0 %v476
        %v478 = vpop.xlane.xlu0 %477
        %v479 = vsel %vm310, %v302, 0.0
        %480 = vadd.xlane.f32.xlu0 %v479
        %v481 = vpop.xlane.xlu0 %480
        %v482 = vsel %vm310, %v303, 0.0
        %483 = vadd.xlane.f32.xlu0 %v482
        %v484 = vpop.xlane.xlu0 %483
        %v485 = vsel %vm310, %v304, 0.0
        %486 = vadd.xlane.f32.xlu0 %v485
        %v487 = vpop.xlane.xlu0 %486
        %v488 = vsel %vm310, %v305, 0.0
        %489 = vadd.xlane.f32.xlu0 %v488
        %v490 = vpop.xlane.xlu0 %489
        %v491 = vsel %vm310, %v306, 0.0
        %492 = vadd.xlane.f32.xlu0 %v491
        %v493 = vpop.xlane.xlu0 %492
        %v494 = vsel %vm310, %v307, 0.0
        %495 = vadd.xlane.f32.xlu0 %v494
        %v496 = vpop.xlane.xlu0 %495
        %v497 = vsel %vm310, %v308, 0.0
        %498 = vadd.xlane.f32.xlu0 %v497
        %v499 = vpop.xlane.xlu0 %498
        %v500 = vsel %vm310, %v309, 0.0
        %501 = vadd.xlane.f32.xlu0 %v500
        %v502 = vpop.xlane.xlu0 %501
        %v503 = vrcp.pop 32.0
        %v504 = vmul.f32 32.0, %v503
        %v505 = vsub.f32 1.0, %v504
        %v506 = vmul.f32 %v503, %v505
        %v507 = vadd.f32 %v503, %v506
        %vm508 = vweird.f32 %v503
        %v509 = vsel %vm508, %v503, %v507
        %v510 = vmul.f32 %v313, %v509
        %v511 = vmul.f32 %v316, %v509
        %v512 = vmul.f32 %v319, %v509
        %v513 = vmul.f32 %v322, %v509
        %v514 = vmul.f32 %v325, %v509
        %v515 = vmul.f32 %v328, %v509
        %v516 = vmul.f32 %v331, %v509
        %v517 = vmul.f32 %v334, %v509
        %v518 = vmul.f32 %v337, %v509
        %v519 = vmul.f32 %v340, %v509
        %v520 = vmul.f32 %v343, %v509
        %v521 = vmul.f32 %v346, %v509
        %v522 = vmul.f32 %v349, %v509
        %v523 = vmul.f32 %v352, %v509
        %v524 = vmul.f32 %v355, %v509
        %v525 = vmul.f32 %v358, %v509
        %v526 = vmul.f32 %v361, %v509
        %v527 = vmul.f32 %v364, %v509
        %v528 = vmul.f32 %v367, %v509
        %v529 = vmul.f32 %v370, %v509
        %v530 = vmul.f32 %v373, %v509
        %v531 = vmul.f32 %v376, %v509
        %v532 = vmul.f32 %v379, %v509
        %v533 = vmul.f32 %v382, %v509
        %v534 = vmul.f32 %v385, %v509
        %v535 = vmul.f32 %v388, %v509
        %v536 = vmul.f32 %v391, %v509
        %v537 = vmul.f32 %v394, %v509
        %v538 = vmul.f32 %v397, %v509
        %v539 = vmul.f32 %v400, %v509
        %v540 = vmul.f32 %v403, %v509
        %v541 = vmul.f32 %v406, %v509
        %v542 = vmul.f32 %v409, %v509
        %v543 = vmul.f32 %v412, %v509
        %v544 = vmul.f32 %v415, %v509
        %v545 = vmul.f32 %v418, %v509
        %v546 = vmul.f32 %v421, %v509
        %v547 = vmul.f32 %v424, %v509
        %v548 = vmul.f32 %v427, %v509
        %v549 = vmul.f32 %v430, %v509
        %v550 = vmul.f32 %v433, %v509
        %v551 = vmul.f32 %v436, %v509
        %v552 = vmul.f32 %v439, %v509
        %v553 = vmul.f32 %v442, %v509
        %v554 = vmul.f32 %v445, %v509
        %v555 = vmul.f32 %v448, %v509
        %v556 = vmul.f32 %v451, %v509
        %v557 = vmul.f32 %v454, %v509
        %v558 = vmul.f32 %v457, %v509
        %v559 = vmul.f32 %v460, %v509
        %v560 = vmul.f32 %v463, %v509
        %v561 = vmul.f32 %v466, %v509
        %v562 = vmul.f32 %v469, %v509
        %v563 = vmul.f32 %v472, %v509
        %v564 = vmul.f32 %v475, %v509
        %v565 = vmul.f32 %v478, %v509
        %v566 = vmul.f32 %v481, %v509
        %v567 = vmul.f32 %v484, %v509
        %v568 = vmul.f32 %v487, %v509
        %v569 = vmul.f32 %v490, %v509
        %v570 = vmul.f32 %v493, %v509
        %v571 = vmul.f32 %v496, %v509
        %v572 = vmul.f32 %v499, %v509
        %v573 = vmul.f32 %v502, %v509
        %v574 = vsub.f32 %v246, %v510
        %v575 = vsub.f32 %v247, %v511
        %v576 = vsub.f32 %v248, %v512
        %v577 = vsub.f32 %v249, %v513
        %v578 = vsub.f32 %v250, %v514
        %v579 = vsub.f32 %v251, %v515
        %v580 = vsub.f32 %v252, %v516
        %v581 = vsub.f32 %v253, %v517
        %v582 = vsub.f32 %v254, %v518
        %v583 = vsub.f32 %v255, %v519
        %v584 = vsub.f32 %v256, %v520
        %v585 = vsub.f32 %v257, %v521
        %v586 = vsub.f32 %v258, %v522
        %v587 = vsub.f32 %v259, %v523
        %v588 = vsub.f32 %v260, %v524
        %v589 = vsub.f32 %v261, %v525
        %v590 = vsub.f32 %v262, %v526
        %v591 = vsub.f32 %v263, %v527
        %v592 = vsub.f32 %v264, %v528
        %v593 = vsub.f32 %v265, %v529
        %v594 = vsub.f32 %v266, %v530
        %v595 = vsub.f32 %v267, %v531
        %v596 = vsub.f32 %v268, %v532
        %v597 = vsub.f32 %v269, %v533
        %v598 = vsub.f32 %v270, %v534
        %v599 = vsub.f32 %v271, %v535
        %v600 = vsub.f32 %v272, %v536
        %v601 = vsub.f32 %v273, %v537
        %v602 = vsub.f32 %v274, %v538
        %v603 = vsub.f32 %v275, %v539
        %v604 = vsub.f32 %v276, %v540
        %v605 = vsub.f32 %v277, %v541
        %v606 = vsub.f32 %v278, %v542
        %v607 = vsub.f32 %v279, %v543
        %v608 = vsub.f32 %v280, %v544
        %v609 = vsub.f32 %v281, %v545
        %v610 = vsub.f32 %v282, %v546
        %v611 = vsub.f32 %v283, %v547
        %v612 = vsub.f32 %v284, %v548
        %v613 = vsub.f32 %v285, %v549
        %v614 = vsub.f32 %v286, %v550
        %v615 = vsub.f32 %v287, %v551
        %v616 = vsub.f32 %v288, %v552
        %v617 = vsub.f32 %v289, %v553
        %v618 = vsub.f32 %v290, %v554
        %v619 = vsub.f32 %v291, %v555
        %v620 = vsub.f32 %v292, %v556
        %v621 = vsub.f32 %v293, %v557
        %v622 = vsub.f32 %v294, %v558
        %v623 = vsub.f32 %v295, %v559
        %v624 = vsub.f32 %v296, %v560
        %v625 = vsub.f32 %v297, %v561
        %v626 = vsub.f32 %v298, %v562
        %v627 = vsub.f32 %v299, %v563
        %v628 = vsub.f32 %v300, %v564
        %v629 = vsub.f32 %v301, %v565
        %v630 = vsub.f32 %v302, %v566
        %v631 = vsub.f32 %v303, %v567
        %v632 = vsub.f32 %v304, %v568
        %v633 = vsub.f32 %v305, %v569
        %v634 = vsub.f32 %v306, %v570
        %v635 = vsub.f32 %v307, %v571
        %v636 = vsub.f32 %v308, %v572
        %v637 = vsub.f32 %v309, %v573
        %v638 = vmul.f32 %v574, %v574
        %v639 = vmul.f32 %v575, %v575
        %v640 = vmul.f32 %v576, %v576
        %v641 = vmul.f32 %v577, %v577
        %v642 = vmul.f32 %v578, %v578
        %v643 = vmul.f32 %v579, %v579
        %v644 = vmul.f32 %v580, %v580
        %v645 = vmul.f32 %v581, %v581
        %v646 = vmul.f32 %v582, %v582
        %v647 = vmul.f32 %v583, %v583
        %v648 = vmul.f32 %v584, %v584
        %v649 = vmul.f32 %v585, %v585
        %v650 = vmul.f32 %v586, %v586
        %v651 = vmul.f32 %v587, %v587
        %v652 = vmul.f32 %v588, %v588
        %v653 = vmul.f32 %v589, %v589
        %v654 = vmul.f32 %v590, %v590
        %v655 = vmul.f32 %v591, %v591
        %v656 = vmul.f32 %v592, %v592
        %v657 = vmul.f32 %v593, %v593
        %v658 = vmul.f32 %v594, %v594
        %v659 = vmul.f32 %v595, %v595
        %v660 = vmul.f32 %v596, %v596
        %v661 = vmul.f32 %v597, %v597
        %v662 = vmul.f32 %v598, %v598
        %v663 = vmul.f32 %v599, %v599
        %v664 = vmul.f32 %v600, %v600
        %v665 = vmul.f32 %v601, %v601
        %v666 = vmul.f32 %v602, %v602
        %v667 = vmul.f32 %v603, %v603
        %v668 = vmul.f32 %v604, %v604
        %v669 = vmul.f32 %v605, %v605
        %v670 = vmul.f32 %v606, %v606
        %v671 = vmul.f32 %v607, %v607
        %v672 = vmul.f32 %v608, %v608
        %v673 = vmul.f32 %v609, %v609
        %v674 = vmul.f32 %v610, %v610
        %v675 = vmul.f32 %v611, %v611
        %v676 = vmul.f32 %v612, %v612
        %v677 = vmul.f32 %v613, %v613
        %v678 = vmul.f32 %v614, %v614
        %v679 = vmul.f32 %v615, %v615
        %v680 = vmul.f32 %v616, %v616
        %v681 = vmul.f32 %v617, %v617
        %v682 = vmul.f32 %v618, %v618
        %v683 = vmul.f32 %v619, %v619
        %v684 = vmul.f32 %v620, %v620
        %v685 = vmul.f32 %v621, %v621
        %v686 = vmul.f32 %v622, %v622
        %v687 = vmul.f32 %v623, %v623
        %v688 = vmul.f32 %v624, %v624
        %v689 = vmul.f32 %v625, %v625
        %v690 = vmul.f32 %v626, %v626
        %v691 = vmul.f32 %v627, %v627
        %v692 = vmul.f32 %v628, %v628
        %v693 = vmul.f32 %v629, %v629
        %v694 = vmul.f32 %v630, %v630
        %v695 = vmul.f32 %v631, %v631
        %v696 = vmul.f32 %v632, %v632
        %v697 = vmul.f32 %v633, %v633
        %v698 = vmul.f32 %v634, %v634
        %v699 = vmul.f32 %v635, %v635
        %v700 = vmul.f32 %v636, %v636
        %v701 = vmul.f32 %v637, %v637
        %v702 = vsel %vm310, %v638, 0.0
        %703 = vadd.xlane.f32.xlu0 %v702
        %v704 = vpop.xlane.xlu0 %703
        %v705 = vsel %vm310, %v639, 0.0
        %706 = vadd.xlane.f32.xlu0 %v705
        %v707 = vpop.xlane.xlu0 %706
        %v708 = vsel %vm310, %v640, 0.0
        %709 = vadd.xlane.f32.xlu0 %v708
        %v710 = vpop.xlane.xlu0 %709
        %v711 = vsel %vm310, %v641, 0.0
        %712 = vadd.xlane.f32.xlu0 %v711
        %v713 = vpop.xlane.xlu0 %712
        %v714 = vsel %vm310, %v642, 0.0
        %715 = vadd.xlane.f32.xlu0 %v714
        %v716 = vpop.xlane.xlu0 %715
        %v717 = vsel %vm310, %v643, 0.0
        %718 = vadd.xlane.f32.xlu0 %v717
        %v719 = vpop.xlane.xlu0 %718
        %v720 = vsel %vm310, %v644, 0.0
        %721 = vadd.xlane.f32.xlu0 %v720
        %v722 = vpop.xlane.xlu0 %721
        %v723 = vsel %vm310, %v645, 0.0
        %724 = vadd.xlane.f32.xlu0 %v723
        %v725 = vpop.xlane.xlu0 %724
        %v726 = vsel %vm310, %v646, 0.0
        %727 = vadd.xlane.f32.xlu0 %v726
        %v728 = vpop.xlane.xlu0 %727
        %v729 = vsel %vm310, %v647, 0.0
        %730 = vadd.xlane.f32.xlu0 %v729
        %v731 = vpop.xlane.xlu0 %730
        %v732 = vsel %vm310, %v648, 0.0
        %733 = vadd.xlane.f32.xlu0 %v732
        %v734 = vpop.xlane.xlu0 %733
        %v735 = vsel %vm310, %v649, 0.0
        %736 = vadd.xlane.f32.xlu0 %v735
        %v737 = vpop.xlane.xlu0 %736
        %v738 = vsel %vm310, %v650, 0.0
        %739 = vadd.xlane.f32.xlu0 %v738
        %v740 = vpop.xlane.xlu0 %739
        %v741 = vsel %vm310, %v651, 0.0
        %742 = vadd.xlane.f32.xlu0 %v741
        %v743 = vpop.xlane.xlu0 %742
        %v744 = vsel %vm310, %v652, 0.0
        %745 = vadd.xlane.f32.xlu0 %v744
        %v746 = vpop.xlane.xlu0 %745
        %v747 = vsel %vm310, %v653, 0.0
        %748 = vadd.xlane.f32.xlu0 %v747
        %v749 = vpop.xlane.xlu0 %748
        %v750 = vsel %vm310, %v654, 0.0
        %751 = vadd.xlane.f32.xlu0 %v750
        %v752 = vpop.xlane.xlu0 %751
        %v753 = vsel %vm310, %v655, 0.0
        %754 = vadd.xlane.f32.xlu0 %v753
        %v755 = vpop.xlane.xlu0 %754
        %v756 = vsel %vm310, %v656, 0.0
        %757 = vadd.xlane.f32.xlu0 %v756
        %v758 = vpop.xlane.xlu0 %757
        %v759 = vsel %vm310, %v657, 0.0
        %760 = vadd.xlane.f32.xlu0 %v759
        %v761 = vpop.xlane.xlu0 %760
        %v762 = vsel %vm310, %v658, 0.0
        %763 = vadd.xlane.f32.xlu0 %v762
        %v764 = vpop.xlane.xlu0 %763
        %v765 = vsel %vm310, %v659, 0.0
        %766 = vadd.xlane.f32.xlu0 %v765
        %v767 = vpop.xlane.xlu0 %766
        %v768 = vsel %vm310, %v660, 0.0
        %769 = vadd.xlane.f32.xlu0 %v768
        %v770 = vpop.xlane.xlu0 %769
        %v771 = vsel %vm310, %v661, 0.0
        %772 = vadd.xlane.f32.xlu0 %v771
        %v773 = vpop.xlane.xlu0 %772
        %v774 = vsel %vm310, %v662, 0.0
        %775 = vadd.xlane.f32.xlu0 %v774
        %v776 = vpop.xlane.xlu0 %775
        %v777 = vsel %vm310, %v663, 0.0
        %778 = vadd.xlane.f32.xlu0 %v777
        %v779 = vpop.xlane.xlu0 %778
        %v780 = vsel %vm310, %v664, 0.0
        %781 = vadd.xlane.f32.xlu0 %v780
        %v782 = vpop.xlane.xlu0 %781
        %v783 = vsel %vm310, %v665, 0.0
        %784 = vadd.xlane.f32.xlu0 %v783
        %v785 = vpop.xlane.xlu0 %784
        %v786 = vsel %vm310, %v666, 0.0
        %787 = vadd.xlane.f32.xlu0 %v786
        %v788 = vpop.xlane.xlu0 %787
        %v789 = vsel %vm310, %v667, 0.0
        %790 = vadd.xlane.f32.xlu0 %v789
        %v791 = vpop.xlane.xlu0 %790
        %v792 = vsel %vm310, %v668, 0.0
        %793 = vadd.xlane.f32.xlu0 %v792
        %v794 = vpop.xlane.xlu0 %793
        %v795 = vsel %vm310, %v669, 0.0
        %796 = vadd.xlane.f32.xlu0 %v795
        %v797 = vpop.xlane.xlu0 %796
        %v798 = vsel %vm310, %v670, 0.0
        %799 = vadd.xlane.f32.xlu0 %v798
        %v800 = vpop.xlane.xlu0 %799
        %v801 = vsel %vm310, %v671, 0.0
        %802 = vadd.xlane.f32.xlu0 %v801
        %v803 = vpop.xlane.xlu0 %802
        %v804 = vsel %vm310, %v672, 0.0
        %805 = vadd.xlane.f32.xlu0 %v804
        %v806 = vpop.xlane.xlu0 %805
        %v807 = vsel %vm310, %v673, 0.0
        %808 = vadd.xlane.f32.xlu0 %v807
        %v809 = vpop.xlane.xlu0 %808
        %v810 = vsel %vm310, %v674, 0.0
        %811 = vadd.xlane.f32.xlu0 %v810
        %v812 = vpop.xlane.xlu0 %811
        %v813 = vsel %vm310, %v675, 0.0
        %814 = vadd.xlane.f32.xlu0 %v813
        %v815 = vpop.xlane.xlu0 %814
        %v816 = vsel %vm310, %v676, 0.0
        %817 = vadd.xlane.f32.xlu0 %v816
        %v818 = vpop.xlane.xlu0 %817
        %v819 = vsel %vm310, %v677, 0.0
        %820 = vadd.xlane.f32.xlu0 %v819
        %v821 = vpop.xlane.xlu0 %820
        %v822 = vsel %vm310, %v678, 0.0
        %823 = vadd.xlane.f32.xlu0 %v822
        %v824 = vpop.xlane.xlu0 %823
        %v825 = vsel %vm310, %v679, 0.0
        %826 = vadd.xlane.f32.xlu0 %v825
        %v827 = vpop.xlane.xlu0 %826
        %v828 = vsel %vm310, %v680, 0.0
        %829 = vadd.xlane.f32.xlu0 %v828
        %v830 = vpop.xlane.xlu0 %829
        %v831 = vsel %vm310, %v681, 0.0
        %832 = vadd.xlane.f32.xlu0 %v831
        %v833 = vpop.xlane.xlu0 %832
        %v834 = vsel %vm310, %v682, 0.0
        %835 = vadd.xlane.f32.xlu0 %v834
        %v836 = vpop.xlane.xlu0 %835
        %v837 = vsel %vm310, %v683, 0.0
        %838 = vadd.xlane.f32.xlu0 %v837
        %v839 = vpop.xlane.xlu0 %838
        %v840 = vsel %vm310, %v684, 0.0
        %841 = vadd.xlane.f32.xlu0 %v840
        %v842 = vpop.xlane.xlu0 %841
        %v843 = vsel %vm310, %v685, 0.0
        %844 = vadd.xlane.f32.xlu0 %v843
        %v845 = vpop.xlane.xlu0 %844
        %v846 = vsel %vm310, %v686, 0.0
        %847 = vadd.xlane.f32.xlu0 %v846
        %v848 = vpop.xlane.xlu0 %847
        %v849 = vsel %vm310, %v687, 0.0
        %850 = vadd.xlane.f32.xlu0 %v849
        %v851 = vpop.xlane.xlu0 %850
        %v852 = vsel %vm310, %v688, 0.0
        %853 = vadd.xlane.f32.xlu0 %v852
        %v854 = vpop.xlane.xlu0 %853
        %v855 = vsel %vm310, %v689, 0.0
        %856 = vadd.xlane.f32.xlu0 %v855
        %v857 = vpop.xlane.xlu0 %856
        %v858 = vsel %vm310, %v690, 0.0
        %859 = vadd.xlane.f32.xlu0 %v858
        %v860 = vpop.xlane.xlu0 %859
        %v861 = vsel %vm310, %v691, 0.0
        %862 = vadd.xlane.f32.xlu0 %v861
        %v863 = vpop.xlane.xlu0 %862
        %v864 = vsel %vm310, %v692, 0.0
        %865 = vadd.xlane.f32.xlu0 %v864
        %v866 = vpop.xlane.xlu0 %865
        %v867 = vsel %vm310, %v693, 0.0
        %868 = vadd.xlane.f32.xlu0 %v867
        %v869 = vpop.xlane.xlu0 %868
        %v870 = vsel %vm310, %v694, 0.0
        %871 = vadd.xlane.f32.xlu0 %v870
        %v872 = vpop.xlane.xlu0 %871
        %v873 = vsel %vm310, %v695, 0.0
        %874 = vadd.xlane.f32.xlu0 %v873
        %v875 = vpop.xlane.xlu0 %874
        %v876 = vsel %vm310, %v696, 0.0
        %877 = vadd.xlane.f32.xlu0 %v876
        %v878 = vpop.xlane.xlu0 %877
        %v879 = vsel %vm310, %v697, 0.0
        %880 = vadd.xlane.f32.xlu0 %v879
        %v881 = vpop.xlane.xlu0 %880
        %v882 = vsel %vm310, %v698, 0.0
        %883 = vadd.xlane.f32.xlu0 %v882
        %v884 = vpop.xlane.xlu0 %883
        %v885 = vsel %vm310, %v699, 0.0
        %886 = vadd.xlane.f32.xlu0 %v885
        %v887 = vpop.xlane.xlu0 %886
        %v888 = vsel %vm310, %v700, 0.0
        %889 = vadd.xlane.f32.xlu0 %v888
        %v890 = vpop.xlane.xlu0 %889
        %v891 = vsel %vm310, %v701, 0.0
        %892 = vadd.xlane.f32.xlu0 %v891
        %v893 = vpop.xlane.xlu0 %892
        %v894 = vmul.f32 %v704, %v509
        %v895 = vmul.f32 %v707, %v509
        %v896 = vmul.f32 %v710, %v509
        %v897 = vmul.f32 %v713, %v509
        %v898 = vmul.f32 %v716, %v509
        %v899 = vmul.f32 %v719, %v509
        %v900 = vmul.f32 %v722, %v509
        %v901 = vmul.f32 %v725, %v509
        %v902 = vmul.f32 %v728, %v509
        %v903 = vmul.f32 %v731, %v509
        %v904 = vmul.f32 %v734, %v509
        %v905 = vmul.f32 %v737, %v509
        %v906 = vmul.f32 %v740, %v509
        %v907 = vmul.f32 %v743, %v509
        %v908 = vmul.f32 %v746, %v509
        %v909 = vmul.f32 %v749, %v509
        %v910 = vmul.f32 %v752, %v509
        %v911 = vmul.f32 %v755, %v509
        %v912 = vmul.f32 %v758, %v509
        %v913 = vmul.f32 %v761, %v509
        %v914 = vmul.f32 %v764, %v509
        %v915 = vmul.f32 %v767, %v509
        %v916 = vmul.f32 %v770, %v509
        %v917 = vmul.f32 %v773, %v509
        %v918 = vmul.f32 %v776, %v509
        %v919 = vmul.f32 %v779, %v509
        %v920 = vmul.f32 %v782, %v509
        %v921 = vmul.f32 %v785, %v509
        %v922 = vmul.f32 %v788, %v509
        %v923 = vmul.f32 %v791, %v509
        %v924 = vmul.f32 %v794, %v509
        %v925 = vmul.f32 %v797, %v509
        %v926 = vmul.f32 %v800, %v509
        %v927 = vmul.f32 %v803, %v509
        %v928 = vmul.f32 %v806, %v509
        %v929 = vmul.f32 %v809, %v509
        %v930 = vmul.f32 %v812, %v509
        %v931 = vmul.f32 %v815, %v509
        %v932 = vmul.f32 %v818, %v509
        %v933 = vmul.f32 %v821, %v509
        %v934 = vmul.f32 %v824, %v509
        %v935 = vmul.f32 %v827, %v509
        %v936 = vmul.f32 %v830, %v509
        %v937 = vmul.f32 %v833, %v509
        %v938 = vmul.f32 %v836, %v509
        %v939 = vmul.f32 %v839, %v509
        %v940 = vmul.f32 %v842, %v509
        %v941 = vmul.f32 %v845, %v509
        %v942 = vmul.f32 %v848, %v509
        %v943 = vmul.f32 %v851, %v509
        %v944 = vmul.f32 %v854, %v509
        %v945 = vmul.f32 %v857, %v509
        %v946 = vmul.f32 %v860, %v509
        %v947 = vmul.f32 %v863, %v509
        %v948 = vmul.f32 %v866, %v509
        %v949 = vmul.f32 %v869, %v509
        %v950 = vmul.f32 %v872, %v509
        %v951 = vmul.f32 %v875, %v509
        %v952 = vmul.f32 %v878, %v509
        %v953 = vmul.f32 %v881, %v509
        %v954 = vmul.f32 %v884, %v509
        %v955 = vmul.f32 %v887, %v509
        %v956 = vmul.f32 %v890, %v509
        %v957 = vmul.f32 %v893, %v509
        %v958 = vadd.f32 %v894, 1e-06
        %v959 = vadd.f32 %v895, 1e-06
        %v960 = vadd.f32 %v896, 1e-06
        %v961 = vadd.f32 %v897, 1e-06
        %v962 = vadd.f32 %v898, 1e-06
        %v963 = vadd.f32 %v899, 1e-06
        %v964 = vadd.f32 %v900, 1e-06
        %v965 = vadd.f32 %v901, 1e-06
        %v966 = vadd.f32 %v902, 1e-06
        %v967 = vadd.f32 %v903, 1e-06
        %v968 = vadd.f32 %v904, 1e-06
        %v969 = vadd.f32 %v905, 1e-06
        %v970 = vadd.f32 %v906, 1e-06
        %v971 = vadd.f32 %v907, 1e-06
        %v972 = vadd.f32 %v908, 1e-06
        %v973 = vadd.f32 %v909, 1e-06
        %v974 = vadd.f32 %v910, 1e-06
        %v975 = vadd.f32 %v911, 1e-06
        %v976 = vadd.f32 %v912, 1e-06
        %v977 = vadd.f32 %v913, 1e-06
        %v978 = vadd.f32 %v914, 1e-06
        %v979 = vadd.f32 %v915, 1e-06
        %v980 = vadd.f32 %v916, 1e-06
        %v981 = vadd.f32 %v917, 1e-06
        %v982 = vadd.f32 %v918, 1e-06
        %v983 = vadd.f32 %v919, 1e-06
        %v984 = vadd.f32 %v920, 1e-06
        %v985 = vadd.f32 %v921, 1e-06
        %v986 = vadd.f32 %v922, 1e-06
        %v987 = vadd.f32 %v923, 1e-06
        %v988 = vadd.f32 %v924, 1e-06
        %v989 = vadd.f32 %v925, 1e-06
        %v990 = vadd.f32 %v926, 1e-06
        %v991 = vadd.f32 %v927, 1e-06
        %v992 = vadd.f32 %v928, 1e-06
        %v993 = vadd.f32 %v929, 1e-06
        %v994 = vadd.f32 %v930, 1e-06
        %v995 = vadd.f32 %v931, 1e-06
        %v996 = vadd.f32 %v932, 1e-06
        %v997 = vadd.f32 %v933, 1e-06
        %v998 = vadd.f32 %v934, 1e-06
        %v999 = vadd.f32 %v935, 1e-06
        %v1000 = vadd.f32 %v936, 1e-06
        %v1001 = vadd.f32 %v937, 1e-06
        %v1002 = vadd.f32 %v938, 1e-06
        %v1003 = vadd.f32 %v939, 1e-06
        %v1004 = vadd.f32 %v940, 1e-06
        %v1005 = vadd.f32 %v941, 1e-06
        %v1006 = vadd.f32 %v942, 1e-06
        %v1007 = vadd.f32 %v943, 1e-06
        %v1008 = vadd.f32 %v944, 1e-06
        %v1009 = vadd.f32 %v945, 1e-06
        %v1010 = vadd.f32 %v946, 1e-06
        %v1011 = vadd.f32 %v947, 1e-06
        %v1012 = vadd.f32 %v948, 1e-06
        %v1013 = vadd.f32 %v949, 1e-06
        %v1014 = vadd.f32 %v950, 1e-06
        %v1015 = vadd.f32 %v951, 1e-06
        %v1016 = vadd.f32 %v952, 1e-06
        %v1017 = vadd.f32 %v953, 1e-06
        %v1018 = vadd.f32 %v954, 1e-06
        %v1019 = vadd.f32 %v955, 1e-06
        %v1020 = vadd.f32 %v956, 1e-06
        %v1021 = vadd.f32 %v957, 1e-06
        %v1022 = vrsqrt.pop %v958
        %v1023 = vmul.f32 %v1022, %v958
        %v1024 = vmul.f32 %v1023, %v1022
        %v1025 = vmul.f32 0.5, %v1024
        %v1026 = vsub.f32 1.5, %v1025
        %v1027 = vmul.f32 %v1022, %v1026
        %vm1028 = vweird.f32 %v958
        %vm1029 = vweird.f32 %v1022
        %vm1030 = vmor %vm1028, %vm1029
        %v1031 = vsel %vm1030, %v1022, %v1027
        %v1032 = vrsqrt.pop %v959
        %v1033 = vmul.f32 %v1032, %v959
        %v1034 = vmul.f32 %v1033, %v1032
        %v1035 = vmul.f32 0.5, %v1034
        %v1036 = vsub.f32 1.5, %v1035
        %v1037 = vmul.f32 %v1032, %v1036
        %vm1038 = vweird.f32 %v959
        %vm1039 = vweird.f32 %v1032
        %vm1040 = vmor %vm1038, %vm1039
        %v1041 = vsel %vm1040, %v1032, %v1037
        %v1042 = vrsqrt.pop %v960
        %v1043 = vmul.f32 %v1042, %v960
        %v1044 = vmul.f32 %v1043, %v1042
        %v1045 = vmul.f32 0.5, %v1044
        %v1046 = vsub.f32 1.5, %v1045
        %v1047 = vmul.f32 %v1042, %v1046
        %vm1048 = vweird.f32 %v960
        %vm1049 = vweird.f32 %v1042
        %vm1050 = vmor %vm1048, %vm1049
        %v1051 = vsel %vm1050, %v1042, %v1047
        %v1052 = vrsqrt.pop %v961
        %v1053 = vmul.f32 %v1052, %v961
        %v1054 = vmul.f32 %v1053, %v1052
        %v1055 = vmul.f32 0.5, %v1054
        %v1056 = vsub.f32 1.5, %v1055
        %v1057 = vmul.f32 %v1052, %v1056
        %vm1058 = vweird.f32 %v961
        %vm1059 = vweird.f32 %v1052
        %vm1060 = vmor %vm1058, %vm1059
        %v1061 = vsel %vm1060, %v1052, %v1057
        %v1062 = vrsqrt.pop %v962
        %v1063 = vmul.f32 %v1062, %v962
        %v1064 = vmul.f32 %v1063, %v1062
        %v1065 = vmul.f32 0.5, %v1064
        %v1066 = vsub.f32 1.5, %v1065
        %v1067 = vmul.f32 %v1062, %v1066
        %vm1068 = vweird.f32 %v962
        %vm1069 = vweird.f32 %v1062
        %vm1070 = vmor %vm1068, %vm1069
        %v1071 = vsel %vm1070, %v1062, %v1067
        %v1072 = vrsqrt.pop %v963
        %v1073 = vmul.f32 %v1072, %v963
        %v1074 = vmul.f32 %v1073, %v1072
        %v1075 = vmul.f32 0.5, %v1074
        %v1076 = vsub.f32 1.5, %v1075
        %v1077 = vmul.f32 %v1072, %v1076
        %vm1078 = vweird.f32 %v963
        %vm1079 = vweird.f32 %v1072
        %vm1080 = vmor %vm1078, %vm1079
        %v1081 = vsel %vm1080, %v1072, %v1077
        %v1082 = vrsqrt.pop %v964
        %v1083 = vmul.f32 %v1082, %v964
        %v1084 = vmul.f32 %v1083, %v1082
        %v1085 = vmul.f32 0.5, %v1084
        %v1086 = vsub.f32 1.5, %v1085
        %v1087 = vmul.f32 %v1082, %v1086
        %vm1088 = vweird.f32 %v964
        %vm1089 = vweird.f32 %v1082
        %vm1090 = vmor %vm1088, %vm1089
        %v1091 = vsel %vm1090, %v1082, %v1087
        %v1092 = vrsqrt.pop %v965
        %v1093 = vmul.f32 %v1092, %v965
        %v1094 = vmul.f32 %v1093, %v1092
        %v1095 = vmul.f32 0.5, %v1094
        %v1096 = vsub.f32 1.5, %v1095
        %v1097 = vmul.f32 %v1092, %v1096
        %vm1098 = vweird.f32 %v965
        %vm1099 = vweird.f32 %v1092
        %vm1100 = vmor %vm1098, %vm1099
        %v1101 = vsel %vm1100, %v1092, %v1097
        %v1102 = vrsqrt.pop %v966
        %v1103 = vmul.f32 %v1102, %v966
        %v1104 = vmul.f32 %v1103, %v1102
        %v1105 = vmul.f32 0.5, %v1104
        %v1106 = vsub.f32 1.5, %v1105
        %v1107 = vmul.f32 %v1102, %v1106
        %vm1108 = vweird.f32 %v966
        %vm1109 = vweird.f32 %v1102
        %vm1110 = vmor %vm1108, %vm1109
        %v1111 = vsel %vm1110, %v1102, %v1107
        %v1112 = vrsqrt.pop %v967
        %v1113 = vmul.f32 %v1112, %v967
        %v1114 = vmul.f32 %v1113, %v1112
        %v1115 = vmul.f32 0.5, %v1114
        %v1116 = vsub.f32 1.5, %v1115
        %v1117 = vmul.f32 %v1112, %v1116
        %vm1118 = vweird.f32 %v967
        %vm1119 = vweird.f32 %v1112
        %vm1120 = vmor %vm1118, %vm1119
        %v1121 = vsel %vm1120, %v1112, %v1117
        %v1122 = vrsqrt.pop %v968
        %v1123 = vmul.f32 %v1122, %v968
        %v1124 = vmul.f32 %v1123, %v1122
        %v1125 = vmul.f32 0.5, %v1124
        %v1126 = vsub.f32 1.5, %v1125
        %v1127 = vmul.f32 %v1122, %v1126
        %vm1128 = vweird.f32 %v968
        %vm1129 = vweird.f32 %v1122
        %vm1130 = vmor %vm1128, %vm1129
        %v1131 = vsel %vm1130, %v1122, %v1127
        %v1132 = vrsqrt.pop %v969
        %v1133 = vmul.f32 %v1132, %v969
        %v1134 = vmul.f32 %v1133, %v1132
        %v1135 = vmul.f32 0.5, %v1134
        %v1136 = vsub.f32 1.5, %v1135
        %v1137 = vmul.f32 %v1132, %v1136
        %vm1138 = vweird.f32 %v969
        %vm1139 = vweird.f32 %v1132
        %vm1140 = vmor %vm1138, %vm1139
        %v1141 = vsel %vm1140, %v1132, %v1137
        %v1142 = vrsqrt.pop %v970
        %v1143 = vmul.f32 %v1142, %v970
        %v1144 = vmul.f32 %v1143, %v1142
        %v1145 = vmul.f32 0.5, %v1144
        %v1146 = vsub.f32 1.5, %v1145
        %v1147 = vmul.f32 %v1142, %v1146
        %vm1148 = vweird.f32 %v970
        %vm1149 = vweird.f32 %v1142
        %vm1150 = vmor %vm1148, %vm1149
        %v1151 = vsel %vm1150, %v1142, %v1147
        %v1152 = vrsqrt.pop %v971
        %v1153 = vmul.f32 %v1152, %v971
        %v1154 = vmul.f32 %v1153, %v1152
        %v1155 = vmul.f32 0.5, %v1154
        %v1156 = vsub.f32 1.5, %v1155
        %v1157 = vmul.f32 %v1152, %v1156
        %vm1158 = vweird.f32 %v971
        %vm1159 = vweird.f32 %v1152
        %vm1160 = vmor %vm1158, %vm1159
        %v1161 = vsel %vm1160, %v1152, %v1157
        %v1162 = vrsqrt.pop %v972
        %v1163 = vmul.f32 %v1162, %v972
        %v1164 = vmul.f32 %v1163, %v1162
        %v1165 = vmul.f32 0.5, %v1164
        %v1166 = vsub.f32 1.5, %v1165
        %v1167 = vmul.f32 %v1162, %v1166
        %vm1168 = vweird.f32 %v972
        %vm1169 = vweird.f32 %v1162
        %vm1170 = vmor %vm1168, %vm1169
        %v1171 = vsel %vm1170, %v1162, %v1167
        %v1172 = vrsqrt.pop %v973
        %v1173 = vmul.f32 %v1172, %v973
        %v1174 = vmul.f32 %v1173, %v1172
        %v1175 = vmul.f32 0.5, %v1174
        %v1176 = vsub.f32 1.5, %v1175
        %v1177 = vmul.f32 %v1172, %v1176
        %vm1178 = vweird.f32 %v973
        %vm1179 = vweird.f32 %v1172
        %vm1180 = vmor %vm1178, %vm1179
        %v1181 = vsel %vm1180, %v1172, %v1177
        %v1182 = vrsqrt.pop %v974
        %v1183 = vmul.f32 %v1182, %v974
        %v1184 = vmul.f32 %v1183, %v1182
        %v1185 = vmul.f32 0.5, %v1184
        %v1186 = vsub.f32 1.5, %v1185
        %v1187 = vmul.f32 %v1182, %v1186
        %vm1188 = vweird.f32 %v974
        %vm1189 = vweird.f32 %v1182
        %vm1190 = vmor %vm1188, %vm1189
        %v1191 = vsel %vm1190, %v1182, %v1187
        %v1192 = vrsqrt.pop %v975
        %v1193 = vmul.f32 %v1192, %v975
        %v1194 = vmul.f32 %v1193, %v1192
        %v1195 = vmul.f32 0.5, %v1194
        %v1196 = vsub.f32 1.5, %v1195
        %v1197 = vmul.f32 %v1192, %v1196
        %vm1198 = vweird.f32 %v975
        %vm1199 = vweird.f32 %v1192
        %vm1200 = vmor %vm1198, %vm1199
        %v1201 = vsel %vm1200, %v1192, %v1197
        %v1202 = vrsqrt.pop %v976
        %v1203 = vmul.f32 %v1202, %v976
        %v1204 = vmul.f32 %v1203, %v1202
        %v1205 = vmul.f32 0.5, %v1204
        %v1206 = vsub.f32 1.5, %v1205
        %v1207 = vmul.f32 %v1202, %v1206
        %vm1208 = vweird.f32 %v976
        %vm1209 = vweird.f32 %v1202
        %vm1210 = vmor %vm1208, %vm1209
        %v1211 = vsel %vm1210, %v1202, %v1207
        %v1212 = vrsqrt.pop %v977
        %v1213 = vmul.f32 %v1212, %v977
        %v1214 = vmul.f32 %v1213, %v1212
        %v1215 = vmul.f32 0.5, %v1214
        %v1216 = vsub.f32 1.5, %v1215
        %v1217 = vmul.f32 %v1212, %v1216
        %vm1218 = vweird.f32 %v977
        %vm1219 = vweird.f32 %v1212
        %vm1220 = vmor %vm1218, %vm1219
        %v1221 = vsel %vm1220, %v1212, %v1217
        %v1222 = vrsqrt.pop %v978
        %v1223 = vmul.f32 %v1222, %v978
        %v1224 = vmul.f32 %v1223, %v1222
        %v1225 = vmul.f32 0.5, %v1224
        %v1226 = vsub.f32 1.5, %v1225
        %v1227 = vmul.f32 %v1222, %v1226
        %vm1228 = vweird.f32 %v978
        %vm1229 = vweird.f32 %v1222
        %vm1230 = vmor %vm1228, %vm1229
        %v1231 = vsel %vm1230, %v1222, %v1227
        %v1232 = vrsqrt.pop %v979
        %v1233 = vmul.f32 %v1232, %v979
        %v1234 = vmul.f32 %v1233, %v1232
        %v1235 = vmul.f32 0.5, %v1234
        %v1236 = vsub.f32 1.5, %v1235
        %v1237 = vmul.f32 %v1232, %v1236
        %vm1238 = vweird.f32 %v979
        %vm1239 = vweird.f32 %v1232
        %vm1240 = vmor %vm1238, %vm1239
        %v1241 = vsel %vm1240, %v1232, %v1237
        %v1242 = vrsqrt.pop %v980
        %v1243 = vmul.f32 %v1242, %v980
        %v1244 = vmul.f32 %v1243, %v1242
        %v1245 = vmul.f32 0.5, %v1244
        %v1246 = vsub.f32 1.5, %v1245
        %v1247 = vmul.f32 %v1242, %v1246
        %vm1248 = vweird.f32 %v980
        %vm1249 = vweird.f32 %v1242
        %vm1250 = vmor %vm1248, %vm1249
        %v1251 = vsel %vm1250, %v1242, %v1247
        %v1252 = vrsqrt.pop %v981
        %v1253 = vmul.f32 %v1252, %v981
        %v1254 = vmul.f32 %v1253, %v1252
        %v1255 = vmul.f32 0.5, %v1254
        %v1256 = vsub.f32 1.5, %v1255
        %v1257 = vmul.f32 %v1252, %v1256
        %vm1258 = vweird.f32 %v981
        %vm1259 = vweird.f32 %v1252
        %vm1260 = vmor %vm1258, %vm1259
        %v1261 = vsel %vm1260, %v1252, %v1257
        %v1262 = vrsqrt.pop %v982
        %v1263 = vmul.f32 %v1262, %v982
        %v1264 = vmul.f32 %v1263, %v1262
        %v1265 = vmul.f32 0.5, %v1264
        %v1266 = vsub.f32 1.5, %v1265
        %v1267 = vmul.f32 %v1262, %v1266
        %vm1268 = vweird.f32 %v982
        %vm1269 = vweird.f32 %v1262
        %vm1270 = vmor %vm1268, %vm1269
        %v1271 = vsel %vm1270, %v1262, %v1267
        %v1272 = vrsqrt.pop %v983
        %v1273 = vmul.f32 %v1272, %v983
        %v1274 = vmul.f32 %v1273, %v1272
        %v1275 = vmul.f32 0.5, %v1274
        %v1276 = vsub.f32 1.5, %v1275
        %v1277 = vmul.f32 %v1272, %v1276
        %vm1278 = vweird.f32 %v983
        %vm1279 = vweird.f32 %v1272
        %vm1280 = vmor %vm1278, %vm1279
        %v1281 = vsel %vm1280, %v1272, %v1277
        %v1282 = vrsqrt.pop %v984
        %v1283 = vmul.f32 %v1282, %v984
        %v1284 = vmul.f32 %v1283, %v1282
        %v1285 = vmul.f32 0.5, %v1284
        %v1286 = vsub.f32 1.5, %v1285
        %v1287 = vmul.f32 %v1282, %v1286
        %vm1288 = vweird.f32 %v984
        %vm1289 = vweird.f32 %v1282
        %vm1290 = vmor %vm1288, %vm1289
        %v1291 = vsel %vm1290, %v1282, %v1287
        %v1292 = vrsqrt.pop %v985
        %v1293 = vmul.f32 %v1292, %v985
        %v1294 = vmul.f32 %v1293, %v1292
        %v1295 = vmul.f32 0.5, %v1294
        %v1296 = vsub.f32 1.5, %v1295
        %v1297 = vmul.f32 %v1292, %v1296
        %vm1298 = vweird.f32 %v985
        %vm1299 = vweird.f32 %v1292
        %vm1300 = vmor %vm1298, %vm1299
        %v1301 = vsel %vm1300, %v1292, %v1297
        %v1302 = vrsqrt.pop %v986
        %v1303 = vmul.f32 %v1302, %v986
        %v1304 = vmul.f32 %v1303, %v1302
        %v1305 = vmul.f32 0.5, %v1304
        %v1306 = vsub.f32 1.5, %v1305
        %v1307 = vmul.f32 %v1302, %v1306
        %vm1308 = vweird.f32 %v986
        %vm1309 = vweird.f32 %v1302
        %vm1310 = vmor %vm1308, %vm1309
        %v1311 = vsel %vm1310, %v1302, %v1307
        %v1312 = vrsqrt.pop %v987
        %v1313 = vmul.f32 %v1312, %v987
        %v1314 = vmul.f32 %v1313, %v1312
        %v1315 = vmul.f32 0.5, %v1314
        %v1316 = vsub.f32 1.5, %v1315
        %v1317 = vmul.f32 %v1312, %v1316
        %vm1318 = vweird.f32 %v987
        %vm1319 = vweird.f32 %v1312
        %vm1320 = vmor %vm1318, %vm1319
        %v1321 = vsel %vm1320, %v1312, %v1317
        %v1322 = vrsqrt.pop %v988
        %v1323 = vmul.f32 %v1322, %v988
        %v1324 = vmul.f32 %v1323, %v1322
        %v1325 = vmul.f32 0.5, %v1324
        %v1326 = vsub.f32 1.5, %v1325
        %v1327 = vmul.f32 %v1322, %v1326
        %vm1328 = vweird.f32 %v988
        %vm1329 = vweird.f32 %v1322
        %vm1330 = vmor %vm1328, %vm1329
        %v1331 = vsel %vm1330, %v1322, %v1327
        %v1332 = vrsqrt.pop %v989
        %v1333 = vmul.f32 %v1332, %v989
        %v1334 = vmul.f32 %v1333, %v1332
        %v1335 = vmul.f32 0.5, %v1334
        %v1336 = vsub.f32 1.5, %v1335
        %v1337 = vmul.f32 %v1332, %v1336
        %vm1338 = vweird.f32 %v989
        %vm1339 = vweird.f32 %v1332
        %vm1340 = vmor %vm1338, %vm1339
        %v1341 = vsel %vm1340, %v1332, %v1337
        %v1342 = vrsqrt.pop %v990
        %v1343 = vmul.f32 %v1342, %v990
        %v1344 = vmul.f32 %v1343, %v1342
        %v1345 = vmul.f32 0.5, %v1344
        %v1346 = vsub.f32 1.5, %v1345
        %v1347 = vmul.f32 %v1342, %v1346
        %vm1348 = vweird.f32 %v990
        %vm1349 = vweird.f32 %v1342
        %vm1350 = vmor %vm1348, %vm1349
        %v1351 = vsel %vm1350, %v1342, %v1347
        %v1352 = vrsqrt.pop %v991
        %v1353 = vmul.f32 %v1352, %v991
        %v1354 = vmul.f32 %v1353, %v1352
        %v1355 = vmul.f32 0.5, %v1354
        %v1356 = vsub.f32 1.5, %v1355
        %v1357 = vmul.f32 %v1352, %v1356
        %vm1358 = vweird.f32 %v991
        %vm1359 = vweird.f32 %v1352
        %vm1360 = vmor %vm1358, %vm1359
        %v1361 = vsel %vm1360, %v1352, %v1357
        %v1362 = vrsqrt.pop %v992
        %v1363 = vmul.f32 %v1362, %v992
        %v1364 = vmul.f32 %v1363, %v1362
        %v1365 = vmul.f32 0.5, %v1364
        %v1366 = vsub.f32 1.5, %v1365
        %v1367 = vmul.f32 %v1362, %v1366
        %vm1368 = vweird.f32 %v992
        %vm1369 = vweird.f32 %v1362
        %vm1370 = vmor %vm1368, %vm1369
        %v1371 = vsel %vm1370, %v1362, %v1367
        %v1372 = vrsqrt.pop %v993
        %v1373 = vmul.f32 %v1372, %v993
        %v1374 = vmul.f32 %v1373, %v1372
        %v1375 = vmul.f32 0.5, %v1374
        %v1376 = vsub.f32 1.5, %v1375
        %v1377 = vmul.f32 %v1372, %v1376
        %vm1378 = vweird.f32 %v993
        %vm1379 = vweird.f32 %v1372
        %vm1380 = vmor %vm1378, %vm1379
        %v1381 = vsel %vm1380, %v1372, %v1377
        %v1382 = vrsqrt.pop %v994
        %v1383 = vmul.f32 %v1382, %v994
        %v1384 = vmul.f32 %v1383, %v1382
        %v1385 = vmul.f32 0.5, %v1384
        %v1386 = vsub.f32 1.5, %v1385
        %v1387 = vmul.f32 %v1382, %v1386
        %vm1388 = vweird.f32 %v994
        %vm1389 = vweird.f32 %v1382
        %vm1390 = vmor %vm1388, %vm1389
        %v1391 = vsel %vm1390, %v1382, %v1387
        %v1392 = vrsqrt.pop %v995
        %v1393 = vmul.f32 %v1392, %v995
        %v1394 = vmul.f32 %v1393, %v1392
        %v1395 = vmul.f32 0.5, %v1394
        %v1396 = vsub.f32 1.5, %v1395
        %v1397 = vmul.f32 %v1392, %v1396
        %vm1398 = vweird.f32 %v995
        %vm1399 = vweird.f32 %v1392
        %vm1400 = vmor %vm1398, %vm1399
        %v1401 = vsel %vm1400, %v1392, %v1397
        %v1402 = vrsqrt.pop %v996
        %v1403 = vmul.f32 %v1402, %v996
        %v1404 = vmul.f32 %v1403, %v1402
        %v1405 = vmul.f32 0.5, %v1404
        %v1406 = vsub.f32 1.5, %v1405
        %v1407 = vmul.f32 %v1402, %v1406
        %vm1408 = vweird.f32 %v996
        %vm1409 = vweird.f32 %v1402
        %vm1410 = vmor %vm1408, %vm1409
        %v1411 = vsel %vm1410, %v1402, %v1407
        %v1412 = vrsqrt.pop %v997
        %v1413 = vmul.f32 %v1412, %v997
        %v1414 = vmul.f32 %v1413, %v1412
        %v1415 = vmul.f32 0.5, %v1414
        %v1416 = vsub.f32 1.5, %v1415
        %v1417 = vmul.f32 %v1412, %v1416
        %vm1418 = vweird.f32 %v997
        %vm1419 = vweird.f32 %v1412
        %vm1420 = vmor %vm1418, %vm1419
        %v1421 = vsel %vm1420, %v1412, %v1417
        %v1422 = vrsqrt.pop %v998
        %v1423 = vmul.f32 %v1422, %v998
        %v1424 = vmul.f32 %v1423, %v1422
        %v1425 = vmul.f32 0.5, %v1424
        %v1426 = vsub.f32 1.5, %v1425
        %v1427 = vmul.f32 %v1422, %v1426
        %vm1428 = vweird.f32 %v998
        %vm1429 = vweird.f32 %v1422
        %vm1430 = vmor %vm1428, %vm1429
        %v1431 = vsel %vm1430, %v1422, %v1427
        %v1432 = vrsqrt.pop %v999
        %v1433 = vmul.f32 %v1432, %v999
        %v1434 = vmul.f32 %v1433, %v1432
        %v1435 = vmul.f32 0.5, %v1434
        %v1436 = vsub.f32 1.5, %v1435
        %v1437 = vmul.f32 %v1432, %v1436
        %vm1438 = vweird.f32 %v999
        %vm1439 = vweird.f32 %v1432
        %vm1440 = vmor %vm1438, %vm1439
        %v1441 = vsel %vm1440, %v1432, %v1437
        %v1442 = vrsqrt.pop %v1000
        %v1443 = vmul.f32 %v1442, %v1000
        %v1444 = vmul.f32 %v1443, %v1442
        %v1445 = vmul.f32 0.5, %v1444
        %v1446 = vsub.f32 1.5, %v1445
        %v1447 = vmul.f32 %v1442, %v1446
        %vm1448 = vweird.f32 %v1000
        %vm1449 = vweird.f32 %v1442
        %vm1450 = vmor %vm1448, %vm1449
        %v1451 = vsel %vm1450, %v1442, %v1447
        %v1452 = vrsqrt.pop %v1001
        %v1453 = vmul.f32 %v1452, %v1001
        %v1454 = vmul.f32 %v1453, %v1452
        %v1455 = vmul.f32 0.5, %v1454
        %v1456 = vsub.f32 1.5, %v1455
        %v1457 = vmul.f32 %v1452, %v1456
        %vm1458 = vweird.f32 %v1001
        %vm1459 = vweird.f32 %v1452
        %vm1460 = vmor %vm1458, %vm1459
        %v1461 = vsel %vm1460, %v1452, %v1457
        %v1462 = vrsqrt.pop %v1002
        %v1463 = vmul.f32 %v1462, %v1002
        %v1464 = vmul.f32 %v1463, %v1462
        %v1465 = vmul.f32 0.5, %v1464
        %v1466 = vsub.f32 1.5, %v1465
        %v1467 = vmul.f32 %v1462, %v1466
        %vm1468 = vweird.f32 %v1002
        %vm1469 = vweird.f32 %v1462
        %vm1470 = vmor %vm1468, %vm1469
        %v1471 = vsel %vm1470, %v1462, %v1467
        %v1472 = vrsqrt.pop %v1003
        %v1473 = vmul.f32 %v1472, %v1003
        %v1474 = vmul.f32 %v1473, %v1472
        %v1475 = vmul.f32 0.5, %v1474
        %v1476 = vsub.f32 1.5, %v1475
        %v1477 = vmul.f32 %v1472, %v1476
        %vm1478 = vweird.f32 %v1003
        %vm1479 = vweird.f32 %v1472
        %vm1480 = vmor %vm1478, %vm1479
        %v1481 = vsel %vm1480, %v1472, %v1477
        %v1482 = vrsqrt.pop %v1004
        %v1483 = vmul.f32 %v1482, %v1004
        %v1484 = vmul.f32 %v1483, %v1482
        %v1485 = vmul.f32 0.5, %v1484
        %v1486 = vsub.f32 1.5, %v1485
        %v1487 = vmul.f32 %v1482, %v1486
        %vm1488 = vweird.f32 %v1004
        %vm1489 = vweird.f32 %v1482
        %vm1490 = vmor %vm1488, %vm1489
        %v1491 = vsel %vm1490, %v1482, %v1487
        %v1492 = vrsqrt.pop %v1005
        %v1493 = vmul.f32 %v1492, %v1005
        %v1494 = vmul.f32 %v1493, %v1492
        %v1495 = vmul.f32 0.5, %v1494
        %v1496 = vsub.f32 1.5, %v1495
        %v1497 = vmul.f32 %v1492, %v1496
        %vm1498 = vweird.f32 %v1005
        %vm1499 = vweird.f32 %v1492
        %vm1500 = vmor %vm1498, %vm1499
        %v1501 = vsel %vm1500, %v1492, %v1497
        %v1502 = vrsqrt.pop %v1006
        %v1503 = vmul.f32 %v1502, %v1006
        %v1504 = vmul.f32 %v1503, %v1502
        %v1505 = vmul.f32 0.5, %v1504
        %v1506 = vsub.f32 1.5, %v1505
        %v1507 = vmul.f32 %v1502, %v1506
        %vm1508 = vweird.f32 %v1006
        %vm1509 = vweird.f32 %v1502
        %vm1510 = vmor %vm1508, %vm1509
        %v1511 = vsel %vm1510, %v1502, %v1507
        %v1512 = vrsqrt.pop %v1007
        %v1513 = vmul.f32 %v1512, %v1007
        %v1514 = vmul.f32 %v1513, %v1512
        %v1515 = vmul.f32 0.5, %v1514
        %v1516 = vsub.f32 1.5, %v1515
        %v1517 = vmul.f32 %v1512, %v1516
        %vm1518 = vweird.f32 %v1007
        %vm1519 = vweird.f32 %v1512
        %vm1520 = vmor %vm1518, %vm1519
        %v1521 = vsel %vm1520, %v1512, %v1517
        %v1522 = vrsqrt.pop %v1008
        %v1523 = vmul.f32 %v1522, %v1008
        %v1524 = vmul.f32 %v1523, %v1522
        %v1525 = vmul.f32 0.5, %v1524
        %v1526 = vsub.f32 1.5, %v1525
        %v1527 = vmul.f32 %v1522, %v1526
        %vm1528 = vweird.f32 %v1008
        %vm1529 = vweird.f32 %v1522
        %vm1530 = vmor %vm1528, %vm1529
        %v1531 = vsel %vm1530, %v1522, %v1527
        %v1532 = vrsqrt.pop %v1009
        %v1533 = vmul.f32 %v1532, %v1009
        %v1534 = vmul.f32 %v1533, %v1532
        %v1535 = vmul.f32 0.5, %v1534
        %v1536 = vsub.f32 1.5, %v1535
        %v1537 = vmul.f32 %v1532, %v1536
        %vm1538 = vweird.f32 %v1009
        %vm1539 = vweird.f32 %v1532
        %vm1540 = vmor %vm1538, %vm1539
        %v1541 = vsel %vm1540, %v1532, %v1537
        %v1542 = vrsqrt.pop %v1010
        %v1543 = vmul.f32 %v1542, %v1010
        %v1544 = vmul.f32 %v1543, %v1542
        %v1545 = vmul.f32 0.5, %v1544
        %v1546 = vsub.f32 1.5, %v1545
        %v1547 = vmul.f32 %v1542, %v1546
        %vm1548 = vweird.f32 %v1010
        %vm1549 = vweird.f32 %v1542
        %vm1550 = vmor %vm1548, %vm1549
        %v1551 = vsel %vm1550, %v1542, %v1547
        %v1552 = vrsqrt.pop %v1011
        %v1553 = vmul.f32 %v1552, %v1011
        %v1554 = vmul.f32 %v1553, %v1552
        %v1555 = vmul.f32 0.5, %v1554
        %v1556 = vsub.f32 1.5, %v1555
        %v1557 = vmul.f32 %v1552, %v1556
        %vm1558 = vweird.f32 %v1011
        %vm1559 = vweird.f32 %v1552
        %vm1560 = vmor %vm1558, %vm1559
        %v1561 = vsel %vm1560, %v1552, %v1557
        %v1562 = vrsqrt.pop %v1012
        %v1563 = vmul.f32 %v1562, %v1012
        %v1564 = vmul.f32 %v1563, %v1562
        %v1565 = vmul.f32 0.5, %v1564
        %v1566 = vsub.f32 1.5, %v1565
        %v1567 = vmul.f32 %v1562, %v1566
        %vm1568 = vweird.f32 %v1012
        %vm1569 = vweird.f32 %v1562
        %vm1570 = vmor %vm1568, %vm1569
        %v1571 = vsel %vm1570, %v1562, %v1567
        %v1572 = vrsqrt.pop %v1013
        %v1573 = vmul.f32 %v1572, %v1013
        %v1574 = vmul.f32 %v1573, %v1572
        %v1575 = vmul.f32 0.5, %v1574
        %v1576 = vsub.f32 1.5, %v1575
        %v1577 = vmul.f32 %v1572, %v1576
        %vm1578 = vweird.f32 %v1013
        %vm1579 = vweird.f32 %v1572
        %vm1580 = vmor %vm1578, %vm1579
        %v1581 = vsel %vm1580, %v1572, %v1577
        %v1582 = vrsqrt.pop %v1014
        %v1583 = vmul.f32 %v1582, %v1014
        %v1584 = vmul.f32 %v1583, %v1582
        %v1585 = vmul.f32 0.5, %v1584
        %v1586 = vsub.f32 1.5, %v1585
        %v1587 = vmul.f32 %v1582, %v1586
        %vm1588 = vweird.f32 %v1014
        %vm1589 = vweird.f32 %v1582
        %vm1590 = vmor %vm1588, %vm1589
        %v1591 = vsel %vm1590, %v1582, %v1587
        %v1592 = vrsqrt.pop %v1015
        %v1593 = vmul.f32 %v1592, %v1015
        %v1594 = vmul.f32 %v1593, %v1592
        %v1595 = vmul.f32 0.5, %v1594
        %v1596 = vsub.f32 1.5, %v1595
        %v1597 = vmul.f32 %v1592, %v1596
        %vm1598 = vweird.f32 %v1015
        %vm1599 = vweird.f32 %v1592
        %vm1600 = vmor %vm1598, %vm1599
        %v1601 = vsel %vm1600, %v1592, %v1597
        %v1602 = vrsqrt.pop %v1016
        %v1603 = vmul.f32 %v1602, %v1016
        %v1604 = vmul.f32 %v1603, %v1602
        %v1605 = vmul.f32 0.5, %v1604
        %v1606 = vsub.f32 1.5, %v1605
        %v1607 = vmul.f32 %v1602, %v1606
        %vm1608 = vweird.f32 %v1016
        %vm1609 = vweird.f32 %v1602
        %vm1610 = vmor %vm1608, %vm1609
        %v1611 = vsel %vm1610, %v1602, %v1607
        %v1612 = vrsqrt.pop %v1017
        %v1613 = vmul.f32 %v1612, %v1017
        %v1614 = vmul.f32 %v1613, %v1612
        %v1615 = vmul.f32 0.5, %v1614
        %v1616 = vsub.f32 1.5, %v1615
        %v1617 = vmul.f32 %v1612, %v1616
        %vm1618 = vweird.f32 %v1017
        %vm1619 = vweird.f32 %v1612
        %vm1620 = vmor %vm1618, %vm1619
        %v1621 = vsel %vm1620, %v1612, %v1617
        %v1622 = vrsqrt.pop %v1018
        %v1623 = vmul.f32 %v1622, %v1018
        %v1624 = vmul.f32 %v1623, %v1622
        %v1625 = vmul.f32 0.5, %v1624
        %v1626 = vsub.f32 1.5, %v1625
        %v1627 = vmul.f32 %v1622, %v1626
        %vm1628 = vweird.f32 %v1018
        %vm1629 = vweird.f32 %v1622
        %vm1630 = vmor %vm1628, %vm1629
        %v1631 = vsel %vm1630, %v1622, %v1627
        %v1632 = vrsqrt.pop %v1019
        %v1633 = vmul.f32 %v1632, %v1019
        %v1634 = vmul.f32 %v1633, %v1632
        %v1635 = vmul.f32 0.5, %v1634
        %v1636 = vsub.f32 1.5, %v1635
        %v1637 = vmul.f32 %v1632, %v1636
        %vm1638 = vweird.f32 %v1019
        %vm1639 = vweird.f32 %v1632
        %vm1640 = vmor %vm1638, %vm1639
        %v1641 = vsel %vm1640, %v1632, %v1637
        %v1642 = vrsqrt.pop %v1020
        %v1643 = vmul.f32 %v1642, %v1020
        %v1644 = vmul.f32 %v1643, %v1642
        %v1645 = vmul.f32 0.5, %v1644
        %v1646 = vsub.f32 1.5, %v1645
        %v1647 = vmul.f32 %v1642, %v1646
        %vm1648 = vweird.f32 %v1020
        %vm1649 = vweird.f32 %v1642
        %vm1650 = vmor %vm1648, %vm1649
        %v1651 = vsel %vm1650, %v1642, %v1647
        %v1652 = vrsqrt.pop %v1021
        %v1653 = vmul.f32 %v1652, %v1021
        %v1654 = vmul.f32 %v1653, %v1652
        %v1655 = vmul.f32 0.5, %v1654
        %v1656 = vsub.f32 1.5, %v1655
        %v1657 = vmul.f32 %v1652, %v1656
        %vm1658 = vweird.f32 %v1021
        %vm1659 = vweird.f32 %v1652
        %vm1660 = vmor %vm1658, %vm1659
        %v1661 = vsel %vm1660, %v1652, %v1657
        %v1662 = vmul.f32 %v574, %v1031
        %v1663 = vmul.f32 %v575, %v1041
        %v1664 = vmul.f32 %v576, %v1051
        %v1665 = vmul.f32 %v577, %v1061
        %v1666 = vmul.f32 %v578, %v1071
        %v1667 = vmul.f32 %v579, %v1081
        %v1668 = vmul.f32 %v580, %v1091
        %v1669 = vmul.f32 %v581, %v1101
        %v1670 = vmul.f32 %v582, %v1111
        %v1671 = vmul.f32 %v583, %v1121
        %v1672 = vmul.f32 %v584, %v1131
        %v1673 = vmul.f32 %v585, %v1141
        %v1674 = vmul.f32 %v586, %v1151
        %v1675 = vmul.f32 %v587, %v1161
        %v1676 = vmul.f32 %v588, %v1171
        %v1677 = vmul.f32 %v589, %v1181
        %v1678 = vmul.f32 %v590, %v1191
        %v1679 = vmul.f32 %v591, %v1201
        %v1680 = vmul.f32 %v592, %v1211
        %v1681 = vmul.f32 %v593, %v1221
        %v1682 = vmul.f32 %v594, %v1231
        %v1683 = vmul.f32 %v595, %v1241
        %v1684 = vmul.f32 %v596, %v1251
        %v1685 = vmul.f32 %v597, %v1261
        %v1686 = vmul.f32 %v598, %v1271
        %v1687 = vmul.f32 %v599, %v1281
        %v1688 = vmul.f32 %v600, %v1291
        %v1689 = vmul.f32 %v601, %v1301
        %v1690 = vmul.f32 %v602, %v1311
        %v1691 = vmul.f32 %v603, %v1321
        %v1692 = vmul.f32 %v604, %v1331
        %v1693 = vmul.f32 %v605, %v1341
        %v1694 = vmul.f32 %v606, %v1351
        %v1695 = vmul.f32 %v607, %v1361
        %v1696 = vmul.f32 %v608, %v1371
        %v1697 = vmul.f32 %v609, %v1381
        %v1698 = vmul.f32 %v610, %v1391
        %v1699 = vmul.f32 %v611, %v1401
        %v1700 = vmul.f32 %v612, %v1411
        %v1701 = vmul.f32 %v613, %v1421
        %v1702 = vmul.f32 %v614, %v1431
        %v1703 = vmul.f32 %v615, %v1441
        %v1704 = vmul.f32 %v616, %v1451
        %v1705 = vmul.f32 %v617, %v1461
        %v1706 = vmul.f32 %v618, %v1471
        %v1707 = vmul.f32 %v619, %v1481
        %v1708 = vmul.f32 %v620, %v1491
        %v1709 = vmul.f32 %v621, %v1501
        %v1710 = vmul.f32 %v622, %v1511
        %v1711 = vmul.f32 %v623, %v1521
        %v1712 = vmul.f32 %v624, %v1531
        %v1713 = vmul.f32 %v625, %v1541
        %v1714 = vmul.f32 %v626, %v1551
        %v1715 = vmul.f32 %v627, %v1561
        %v1716 = vmul.f32 %v628, %v1571
        %v1717 = vmul.f32 %v629, %v1581
        %v1718 = vmul.f32 %v630, %v1591
        %v1719 = vmul.f32 %v631, %v1601
        %v1720 = vmul.f32 %v632, %v1611
        %v1721 = vmul.f32 %v633, %v1621
        %v1722 = vmul.f32 %v634, %v1631
        %v1723 = vmul.f32 %v635, %v1641
        %v1724 = vmul.f32 %v636, %v1651
        %v1725 = vmul.f32 %v637, %v1661
        %v1726 = vld [vmem:[%s1] sm:$0x1]
        %v1728 = vperm.slane %v1726, 0
        %v1730 = vmul.f32 %v1662, %v1728
        %v1731 = vmul.f32 %v1663, %v1728
        %v1732 = vmul.f32 %v1664, %v1728
        %v1733 = vmul.f32 %v1665, %v1728
        %v1734 = vmul.f32 %v1666, %v1728
        %v1735 = vmul.f32 %v1667, %v1728
        %v1736 = vmul.f32 %v1668, %v1728
        %v1737 = vmul.f32 %v1669, %v1728
        %v1738 = vmul.f32 %v1670, %v1728
        %v1739 = vmul.f32 %v1671, %v1728
        %v1740 = vmul.f32 %v1672, %v1728
        %v1741 = vmul.f32 %v1673, %v1728
        %v1742 = vmul.f32 %v1674, %v1728
        %v1743 = vmul.f32 %v1675, %v1728
        %v1744 = vmul.f32 %v1676, %v1728
        %v1745 = vmul.f32 %v1677, %v1728
        %v1746 = vmul.f32 %v1678, %v1728
        %v1747 = vmul.f32 %v1679, %v1728
        %v1748 = vmul.f32 %v1680, %v1728
        %v1749 = vmul.f32 %v1681, %v1728
        %v1750 = vmul.f32 %v1682, %v1728
        %v1751 = vmul.f32 %v1683, %v1728
        %v1752 = vmul.f32 %v1684, %v1728
        %v1753 = vmul.f32 %v1685, %v1728
        %v1754 = vmul.f32 %v1686, %v1728
        %v1755 = vmul.f32 %v1687, %v1728
        %v1756 = vmul.f32 %v1688, %v1728
        %v1757 = vmul.f32 %v1689, %v1728
        %v1758 = vmul.f32 %v1690, %v1728
        %v1759 = vmul.f32 %v1691, %v1728
        %v1760 = vmul.f32 %v1692, %v1728
        %v1761 = vmul.f32 %v1693, %v1728
        %v1762 = vmul.f32 %v1694, %v1728
        %v1763 = vmul.f32 %v1695, %v1728
        %v1764 = vmul.f32 %v1696, %v1728
        %v1765 = vmul.f32 %v1697, %v1728
        %v1766 = vmul.f32 %v1698, %v1728
        %v1767 = vmul.f32 %v1699, %v1728
        %v1768 = vmul.f32 %v1700, %v1728
        %v1769 = vmul.f32 %v1701, %v1728
        %v1770 = vmul.f32 %v1702, %v1728
        %v1771 = vmul.f32 %v1703, %v1728
        %v1772 = vmul.f32 %v1704, %v1728
        %v1773 = vmul.f32 %v1705, %v1728
        %v1774 = vmul.f32 %v1706, %v1728
        %v1775 = vmul.f32 %v1707, %v1728
        %v1776 = vmul.f32 %v1708, %v1728
        %v1777 = vmul.f32 %v1709, %v1728
        %v1778 = vmul.f32 %v1710, %v1728
        %v1779 = vmul.f32 %v1711, %v1728
        %v1780 = vmul.f32 %v1712, %v1728
        %v1781 = vmul.f32 %v1713, %v1728
        %v1782 = vmul.f32 %v1714, %v1728
        %v1783 = vmul.f32 %v1715, %v1728
        %v1784 = vmul.f32 %v1716, %v1728
        %v1785 = vmul.f32 %v1717, %v1728
        %v1786 = vmul.f32 %v1718, %v1728
        %v1787 = vmul.f32 %v1719, %v1728
        %v1788 = vmul.f32 %v1720, %v1728
        %v1789 = vmul.f32 %v1721, %v1728
        %v1790 = vmul.f32 %v1722, %v1728
        %v1791 = vmul.f32 %v1723, %v1728
        %v1792 = vmul.f32 %v1724, %v1728
        %v1793 = vmul.f32 %v1725, %v1728
        %v1794 = vld [vmem:[%s2] sm:$0x1]
        %v1796 = vperm.slane %v1794, 0
        %v1798 = vadd.f32 %v1730, %v1796
        %v1799 = vadd.f32 %v1731, %v1796
        %v1800 = vadd.f32 %v1732, %v1796
        %v1801 = vadd.f32 %v1733, %v1796
        %v1802 = vadd.f32 %v1734, %v1796
        %v1803 = vadd.f32 %v1735, %v1796
        %v1804 = vadd.f32 %v1736, %v1796
        %v1805 = vadd.f32 %v1737, %v1796
        %v1806 = vadd.f32 %v1738, %v1796
        %v1807 = vadd.f32 %v1739, %v1796
        %v1808 = vadd.f32 %v1740, %v1796
        %v1809 = vadd.f32 %v1741, %v1796
        %v1810 = vadd.f32 %v1742, %v1796
        %v1811 = vadd.f32 %v1743, %v1796
        %v1812 = vadd.f32 %v1744, %v1796
        %v1813 = vadd.f32 %v1745, %v1796
        %v1814 = vadd.f32 %v1746, %v1796
        %v1815 = vadd.f32 %v1747, %v1796
        %v1816 = vadd.f32 %v1748, %v1796
        %v1817 = vadd.f32 %v1749, %v1796
        %v1818 = vadd.f32 %v1750, %v1796
        %v1819 = vadd.f32 %v1751, %v1796
        %v1820 = vadd.f32 %v1752, %v1796
        %v1821 = vadd.f32 %v1753, %v1796
        %v1822 = vadd.f32 %v1754, %v1796
        %v1823 = vadd.f32 %v1755, %v1796
        %v1824 = vadd.f32 %v1756, %v1796
        %v1825 = vadd.f32 %v1757, %v1796
        %v1826 = vadd.f32 %v1758, %v1796
        %v1827 = vadd.f32 %v1759, %v1796
        %v1828 = vadd.f32 %v1760, %v1796
        %v1829 = vadd.f32 %v1761, %v1796
        %v1830 = vadd.f32 %v1762, %v1796
        %v1831 = vadd.f32 %v1763, %v1796
        %v1832 = vadd.f32 %v1764, %v1796
        %v1833 = vadd.f32 %v1765, %v1796
        %v1834 = vadd.f32 %v1766, %v1796
        %v1835 = vadd.f32 %v1767, %v1796
        %v1836 = vadd.f32 %v1768, %v1796
        %v1837 = vadd.f32 %v1769, %v1796
        %v1838 = vadd.f32 %v1770, %v1796
        %v1839 = vadd.f32 %v1771, %v1796
        %v1840 = vadd.f32 %v1772, %v1796
        %v1841 = vadd.f32 %v1773, %v1796
        %v1842 = vadd.f32 %v1774, %v1796
        %v1843 = vadd.f32 %v1775, %v1796
        %v1844 = vadd.f32 %v1776, %v1796
        %v1845 = vadd.f32 %v1777, %v1796
        %v1846 = vadd.f32 %v1778, %v1796
        %v1847 = vadd.f32 %v1779, %v1796
        %v1848 = vadd.f32 %v1780, %v1796
        %v1849 = vadd.f32 %v1781, %v1796
        %v1850 = vadd.f32 %v1782, %v1796
        %v1851 = vadd.f32 %v1783, %v1796
        %v1852 = vadd.f32 %v1784, %v1796
        %v1853 = vadd.f32 %v1785, %v1796
        %v1854 = vadd.f32 %v1786, %v1796
        %v1855 = vadd.f32 %v1787, %v1796
        %v1856 = vadd.f32 %v1788, %v1796
        %v1857 = vadd.f32 %v1789, %v1796
        %v1858 = vadd.f32 %v1790, %v1796
        %v1859 = vadd.f32 %v1791, %v1796
        %v1860 = vadd.f32 %v1792, %v1796
        %v1861 = vadd.f32 %v1793, %v1796
        %v1862 = vld [vmem:[%s3] sm:$0xff]
        %v1863 = vld [vmem:[%s3 + $0x8] sm:$0xff]
        %v1864 = vld [vmem:[%s3 + $0x10] sm:$0xff]
        %v1865 = vld [vmem:[%s3 + $0x18] sm:$0xff]
        %v1866 = vld [vmem:[%s4] sm:$0x1]
        %v1868 = vperm.slane %v1866, 0
        %v1871 = vsel %vm310, %v1798, 0
        %v1874 = vsel %vm310, %v1799, 0
        %v1877 = vsel %vm310, %v1800, 0
        %v1880 = vsel %vm310, %v1801, 0
        %v1883 = vsel %vm310, %v1802, 0
        %v1886 = vsel %vm310, %v1803, 0
        %v1889 = vsel %vm310, %v1804, 0
        %v1892 = vsel %vm310, %v1805, 0
        %v1895 = vsel %vm310, %v1806, 0
        %v1898 = vsel %vm310, %v1807, 0
        %v1901 = vsel %vm310, %v1808, 0
        %v1904 = vsel %vm310, %v1809, 0
        %v1907 = vsel %vm310, %v1810, 0
        %v1910 = vsel %vm310, %v1811, 0
        %v1913 = vsel %vm310, %v1812, 0
        %v1916 = vsel %vm310, %v1813, 0
        %v1919 = vsel %vm310, %v1814, 0
        %v1922 = vsel %vm310, %v1815, 0
        %v1925 = vsel %vm310, %v1816, 0
        %v1928 = vsel %vm310, %v1817, 0
        %v1931 = vsel %vm310, %v1818, 0
        %v1934 = vsel %vm310, %v1819, 0
        %v1937 = vsel %vm310, %v1820, 0
        %v1940 = vsel %vm310, %v1821, 0
        %v1943 = vsel %vm310, %v1822, 0
        %v1946 = vsel %vm310, %v1823, 0
        %v1949 = vsel %vm310, %v1824, 0
        %v1952 = vsel %vm310, %v1825, 0
        %v1955 = vsel %vm310, %v1826, 0
        %v1958 = vsel %vm310, %v1827, 0
        %v1961 = vsel %vm310, %v1828, 0
        %v1964 = vsel %vm310, %v1829, 0
        %v1967 = vsel %vm310, %v1830, 0
        %v1970 = vsel %vm310, %v1831, 0
        %v1973 = vsel %vm310, %v1832, 0
        %v1976 = vsel %vm310, %v1833, 0
        %v1979 = vsel %vm310, %v1834, 0
        %v1982 = vsel %vm310, %v1835, 0
        %v1985 = vsel %vm310, %v1836, 0
        %v1988 = vsel %vm310, %v1837, 0
        %v1991 = vsel %vm310, %v1838, 0
        %v1994 = vsel %vm310, %v1839, 0
        %v1997 = vsel %vm310, %v1840, 0
        %v2000 = vsel %vm310, %v1841, 0
        %v2003 = vsel %vm310, %v1842, 0
        %v2006 = vsel %vm310, %v1843, 0
        %v2009 = vsel %vm310, %v1844, 0
        %v2012 = vsel %vm310, %v1845, 0
        %v2015 = vsel %vm310, %v1846, 0
        %v2018 = vsel %vm310, %v1847, 0
        %v2021 = vsel %vm310, %v1848, 0
        %v2024 = vsel %vm310, %v1849, 0
        %v2027 = vsel %vm310, %v1850, 0
        %v2030 = vsel %vm310, %v1851, 0
        %v2033 = vsel %vm310, %v1852, 0
        %v2036 = vsel %vm310, %v1853, 0
        %v2039 = vsel %vm310, %v1854, 0
        %v2042 = vsel %vm310, %v1855, 0
        %v2045 = vsel %vm310, %v1856, 0
        %v2048 = vsel %vm310, %v1857, 0
        %v2051 = vsel %vm310, %v1858, 0
        %v2054 = vsel %vm310, %v1859, 0
        %v2057 = vsel %vm310, %v1860, 0
        %v2060 = vsel %vm310, %v1861, 0
        %2062 = vmatpush.msra.mxu0 0.0
        %2063 = vmatpush.msra.mxu0 0.0
        %2064 = vmatpush.msra.mxu0 0.0
        %2065 = vmatpush.msra.mxu0 0.0
        %2066 = vmatpush.msra.mxu0 0.0
        %2067 = vmatpush.msra.mxu0 0.0
        %2068 = vmatpush.msra.mxu0 0.0
        %2069 = vmatpush.msra.mxu0 0.0
        %2070 = vmatpush.msra.mxu0 0.0
        %2071 = vmatpush.msra.mxu0 0.0
        %2072 = vmatpush.msra.mxu0 0.0
        %2073 = vmatpush.msra.mxu0 0.0
        %2074 = vmatpush.msra.mxu0 %v1865
        %2075 = vmatpush.msra.mxu0 %v1864
        %2076 = vmatpush.msra.mxu0 %v1863
        %2077 = vmatpush.msra.mxu0 %v1862
        %2078 = vmatmul.f32.gmra.mxu0 %v1871
        %v2079 = vpop.f32.mrf.mxu0
        %v2080 = vadd.f32 %v1868, %v2079
        %2081 = vmatmul.f32.gmra.mxu0 %v1874
        %v2082 = vpop.f32.mrf.mxu0
        %v2083 = vadd.f32 %v1868, %v2082
        %2084 = vmatmul.f32.gmra.mxu0 %v1877
        %v2085 = vpop.f32.mrf.mxu0
        %v2086 = vadd.f32 %v1868, %v2085
        %2087 = vmatmul.f32.gmra.mxu0 %v1880
        %v2088 = vpop.f32.mrf.mxu0
        %v2089 = vadd.f32 %v1868, %v2088
        %2090 = vmatmul.f32.gmra.mxu0 %v1883
        %v2091 = vpop.f32.mrf.mxu0
        %v2092 = vadd.f32 %v1868, %v2091
        %2093 = vmatmul.f32.gmra.mxu0 %v1886
        %v2094 = vpop.f32.mrf.mxu0
        %v2095 = vadd.f32 %v1868, %v2094
        %2096 = vmatmul.f32.gmra.mxu0 %v1889
        %v2097 = vpop.f32.mrf.mxu0
        %v2098 = vadd.f32 %v1868, %v2097
        %2099 = vmatmul.f32.gmra.mxu0 %v1892
        %v2100 = vpop.f32.mrf.mxu0
        %v2101 = vadd.f32 %v1868, %v2100
        %2102 = vmatmul.f32.gmra.mxu0 %v1895
        %v2103 = vpop.f32.mrf.mxu0
        %v2104 = vadd.f32 %v1868, %v2103
        %2105 = vmatmul.f32.gmra.mxu0 %v1898
        %v2106 = vpop.f32.mrf.mxu0
        %v2107 = vadd.f32 %v1868, %v2106
        %2108 = vmatmul.f32.gmra.mxu0 %v1901
        %v2109 = vpop.f32.mrf.mxu0
        %v2110 = vadd.f32 %v1868, %v2109
        %2111 = vmatmul.f32.gmra.mxu0 %v1904
        %v2112 = vpop.f32.mrf.mxu0
        %v2113 = vadd.f32 %v1868, %v2112
        %2114 = vmatmul.f32.gmra.mxu0 %v1907
        %v2115 = vpop.f32.mrf.mxu0
        %v2116 = vadd.f32 %v1868, %v2115
        %2117 = vmatmul.f32.gmra.mxu0 %v1910
        %v2118 = vpop.f32.mrf.mxu0
        %v2119 = vadd.f32 %v1868, %v2118
        %2120 = vmatmul.f32.gmra.mxu0 %v1913
        %v2121 = vpop.f32.mrf.mxu0
        %v2122 = vadd.f32 %v1868, %v2121
        %2123 = vmatmul.f32.gmra.mxu0 %v1916
        %v2124 = vpop.f32.mrf.mxu0
        %v2125 = vadd.f32 %v1868, %v2124
        %2126 = vmatmul.f32.gmra.mxu0 %v1919
        %v2127 = vpop.f32.mrf.mxu0
        %v2128 = vadd.f32 %v1868, %v2127
        %2129 = vmatmul.f32.gmra.mxu0 %v1922
        %v2130 = vpop.f32.mrf.mxu0
        %v2131 = vadd.f32 %v1868, %v2130
        %2132 = vmatmul.f32.gmra.mxu0 %v1925
        %v2133 = vpop.f32.mrf.mxu0
        %v2134 = vadd.f32 %v1868, %v2133
        %2135 = vmatmul.f32.gmra.mxu0 %v1928
        %v2136 = vpop.f32.mrf.mxu0
        %v2137 = vadd.f32 %v1868, %v2136
        %2138 = vmatmul.f32.gmra.mxu0 %v1931
        %v2139 = vpop.f32.mrf.mxu0
        %v2140 = vadd.f32 %v1868, %v2139
        %2141 = vmatmul.f32.gmra.mxu0 %v1934
        %v2142 = vpop.f32.mrf.mxu0
        %v2143 = vadd.f32 %v1868, %v2142
        %2144 = vmatmul.f32.gmra.mxu0 %v1937
        %v2145 = vpop.f32.mrf.mxu0
        %v2146 = vadd.f32 %v1868, %v2145
        %2147 = vmatmul.f32.gmra.mxu0 %v1940
        %v2148 = vpop.f32.mrf.mxu0
        %v2149 = vadd.f32 %v1868, %v2148
        %2150 = vmatmul.f32.gmra.mxu0 %v1943
        %v2151 = vpop.f32.mrf.mxu0
        %v2152 = vadd.f32 %v1868, %v2151
        %2153 = vmatmul.f32.gmra.mxu0 %v1946
        %v2154 = vpop.f32.mrf.mxu0
        %v2155 = vadd.f32 %v1868, %v2154
        %2156 = vmatmul.f32.gmra.mxu0 %v1949
        %v2157 = vpop.f32.mrf.mxu0
        %v2158 = vadd.f32 %v1868, %v2157
        %2159 = vmatmul.f32.gmra.mxu0 %v1952
        %v2160 = vpop.f32.mrf.mxu0
        %v2161 = vadd.f32 %v1868, %v2160
        %2162 = vmatmul.f32.gmra.mxu0 %v1955
        %v2163 = vpop.f32.mrf.mxu0
        %v2164 = vadd.f32 %v1868, %v2163
        %2165 = vmatmul.f32.gmra.mxu0 %v1958
        %v2166 = vpop.f32.mrf.mxu0
        %v2167 = vadd.f32 %v1868, %v2166
        %2168 = vmatmul.f32.gmra.mxu0 %v1961
        %v2169 = vpop.f32.mrf.mxu0
        %v2170 = vadd.f32 %v1868, %v2169
        %2171 = vmatmul.f32.gmra.mxu0 %v1964
        %v2172 = vpop.f32.mrf.mxu0
        %v2173 = vadd.f32 %v1868, %v2172
        %2174 = vmatmul.f32.gmra.mxu0 %v1967
        %v2175 = vpop.f32.mrf.mxu0
        %v2176 = vadd.f32 %v1868, %v2175
        %2177 = vmatmul.f32.gmra.mxu0 %v1970
        %v2178 = vpop.f32.mrf.mxu0
        %v2179 = vadd.f32 %v1868, %v2178
        %2180 = vmatmul.f32.gmra.mxu0 %v1973
        %v2181 = vpop.f32.mrf.mxu0
        %v2182 = vadd.f32 %v1868, %v2181
        %2183 = vmatmul.f32.gmra.mxu0 %v1976
        %v2184 = vpop.f32.mrf.mxu0
        %v2185 = vadd.f32 %v1868, %v2184
        %2186 = vmatmul.f32.gmra.mxu0 %v1979
        %v2187 = vpop.f32.mrf.mxu0
        %v2188 = vadd.f32 %v1868, %v2187
        %2189 = vmatmul.f32.gmra.mxu0 %v1982
        %v2190 = vpop.f32.mrf.mxu0
        %v2191 = vadd.f32 %v1868, %v2190
        %2192 = vmatmul.f32.gmra.mxu0 %v1985
        %v2193 = vpop.f32.mrf.mxu0
        %v2194 = vadd.f32 %v1868, %v2193
        %2195 = vmatmul.f32.gmra.mxu0 %v1988
        %v2196 = vpop.f32.mrf.mxu0
        %v2197 = vadd.f32 %v1868, %v2196
        %2198 = vmatmul.f32.gmra.mxu0 %v1991
        %v2199 = vpop.f32.mrf.mxu0
        %v2200 = vadd.f32 %v1868, %v2199
        %2201 = vmatmul.f32.gmra.mxu0 %v1994
        %v2202 = vpop.f32.mrf.mxu0
        %v2203 = vadd.f32 %v1868, %v2202
        %2204 = vmatmul.f32.gmra.mxu0 %v1997
        %v2205 = vpop.f32.mrf.mxu0
        %v2206 = vadd.f32 %v1868, %v2205
        %2207 = vmatmul.f32.gmra.mxu0 %v2000
        %v2208 = vpop.f32.mrf.mxu0
        %v2209 = vadd.f32 %v1868, %v2208
        %2210 = vmatmul.f32.gmra.mxu0 %v2003
        %v2211 = vpop.f32.mrf.mxu0
        %v2212 = vadd.f32 %v1868, %v2211
        %2213 = vmatmul.f32.gmra.mxu0 %v2006
        %v2214 = vpop.f32.mrf.mxu0
        %v2215 = vadd.f32 %v1868, %v2214
        %2216 = vmatmul.f32.gmra.mxu0 %v2009
        %v2217 = vpop.f32.mrf.mxu0
        %v2218 = vadd.f32 %v1868, %v2217
        %2219 = vmatmul.f32.gmra.mxu0 %v2012
        %v2220 = vpop.f32.mrf.mxu0
        %v2221 = vadd.f32 %v1868, %v2220
        %2222 = vmatmul.f32.gmra.mxu0 %v2015
        %v2223 = vpop.f32.mrf.mxu0
        %v2224 = vadd.f32 %v1868, %v2223
        %2225 = vmatmul.f32.gmra.mxu0 %v2018
        %v2226 = vpop.f32.mrf.mxu0
        %v2227 = vadd.f32 %v1868, %v2226
        %2228 = vmatmul.f32.gmra.mxu0 %v2021
        %v2229 = vpop.f32.mrf.mxu0
        %v2230 = vadd.f32 %v1868, %v2229
        %2231 = vmatmul.f32.gmra.mxu0 %v2024
        %v2232 = vpop.f32.mrf.mxu0
        %v2233 = vadd.f32 %v1868, %v2232
        %2234 = vmatmul.f32.gmra.mxu0 %v2027
        %v2235 = vpop.f32.mrf.mxu0
        %v2236 = vadd.f32 %v1868, %v2235
        %2237 = vmatmul.f32.gmra.mxu0 %v2030
        %v2238 = vpop.f32.mrf.mxu0
        %v2239 = vadd.f32 %v1868, %v2238
        %2240 = vmatmul.f32.gmra.mxu0 %v2033
        %v2241 = vpop.f32.mrf.mxu0
        %v2242 = vadd.f32 %v1868, %v2241
        %2243 = vmatmul.f32.gmra.mxu0 %v2036
        %v2244 = vpop.f32.mrf.mxu0
        %v2245 = vadd.f32 %v1868, %v2244
        %2246 = vmatmul.f32.gmra.mxu0 %v2039
        %v2247 = vpop.f32.mrf.mxu0
        %v2248 = vadd.f32 %v1868, %v2247
        %2249 = vmatmul.f32.gmra.mxu0 %v2042
        %v2250 = vpop.f32.mrf.mxu0
        %v2251 = vadd.f32 %v1868, %v2250
        %2252 = vmatmul.f32.gmra.mxu0 %v2045
        %v2253 = vpop.f32.mrf.mxu0
        %v2254 = vadd.f32 %v1868, %v2253
        %2255 = vmatmul.f32.gmra.mxu0 %v2048
        %v2256 = vpop.f32.mrf.mxu0
        %v2257 = vadd.f32 %v1868, %v2256
        %2258 = vmatmul.f32.gmra.mxu0 %v2051
        %v2259 = vpop.f32.mrf.mxu0
        %v2260 = vadd.f32 %v1868, %v2259
        %2261 = vmatmul.f32.gmra.mxu0 %v2054
        %v2262 = vpop.f32.mrf.mxu0
        %v2263 = vadd.f32 %v1868, %v2262
        %2264 = vmatmul.f32.gmra.mxu0 %v2057
        %v2265 = vpop.f32.mrf.mxu0
        %v2266 = vadd.f32 %v1868, %v2265
        %2267 = vmatmul.f32.gmra.mxu0 %v2060
        %v2268 = vpop.f32.mrf.mxu0
        %v2269 = vadd.f32 %v1868, %v2268
        %2270 = vdwg.mxu0
        %2271 = vst.msk [vmem:[%s226] sm:$0xff] %vm310, %v2080
        %2272 = vst.msk [vmem:[%s226 + $0x8] sm:$0xff] %vm310, %v2083
        %2273 = vst.msk [vmem:[%s226 + $0x10] sm:$0xff] %vm310, %v2086
        %2274 = vst.msk [vmem:[%s226 + $0x18] sm:$0xff] %vm310, %v2089
        %2275 = vst.msk [vmem:[%s226 + $0x20] sm:$0xff] %vm310, %v2092
        %2276 = vst.msk [vmem:[%s226 + $0x28] sm:$0xff] %vm310, %v2095
        %2277 = vst.msk [vmem:[%s226 + $0x30] sm:$0xff] %vm310, %v2098
        %2278 = vst.msk [vmem:[%s226 + $0x38] sm:$0xff] %vm310, %v2101
        %2279 = vst.msk [vmem:[%s226 + $0x40] sm:$0xff] %vm310, %v2104
        %2280 = vst.msk [vmem:[%s226 + $0x48] sm:$0xff] %vm310, %v2107
        %2281 = vst.msk [vmem:[%s226 + $0x50] sm:$0xff] %vm310, %v2110
        %2282 = vst.msk [vmem:[%s226 + $0x58] sm:$0xff] %vm310, %v2113
        %2283 = vst.msk [vmem:[%s226 + $0x60] sm:$0xff] %vm310, %v2116
        %2284 = vst.msk [vmem:[%s226 + $0x68] sm:$0xff] %vm310, %v2119
        %2285 = vst.msk [vmem:[%s226 + $0x70] sm:$0xff] %vm310, %v2122
        %2286 = vst.msk [vmem:[%s226 + $0x78] sm:$0xff] %vm310, %v2125
        %2287 = vst.msk [vmem:[%s226 + $0x80] sm:$0xff] %vm310, %v2128
        %2288 = vst.msk [vmem:[%s226 + $0x88] sm:$0xff] %vm310, %v2131
        %2289 = vst.msk [vmem:[%s226 + $0x90] sm:$0xff] %vm310, %v2134
        %2290 = vst.msk [vmem:[%s226 + $0x98] sm:$0xff] %vm310, %v2137
        %2291 = vst.msk [vmem:[%s226 + $0xa0] sm:$0xff] %vm310, %v2140
        %2292 = vst.msk [vmem:[%s226 + $0xa8] sm:$0xff] %vm310, %v2143
        %2293 = vst.msk [vmem:[%s226 + $0xb0] sm:$0xff] %vm310, %v2146
        %2294 = vst.msk [vmem:[%s226 + $0xb8] sm:$0xff] %vm310, %v2149
        %2295 = vst.msk [vmem:[%s226 + $0xc0] sm:$0xff] %vm310, %v2152
        %2296 = vst.msk [vmem:[%s226 + $0xc8] sm:$0xff] %vm310, %v2155
        %2297 = vst.msk [vmem:[%s226 + $0xd0] sm:$0xff] %vm310, %v2158
        %2298 = vst.msk [vmem:[%s226 + $0xd8] sm:$0xff] %vm310, %v2161
        %2299 = vst.msk [vmem:[%s226 + $0xe0] sm:$0xff] %vm310, %v2164
        %2300 = vst.msk [vmem:[%s226 + $0xe8] sm:$0xff] %vm310, %v2167
        %2301 = vst.msk [vmem:[%s226 + $0xf0] sm:$0xff] %vm310, %v2170
        %2302 = vst.msk [vmem:[%s226 + $0xf8] sm:$0xff] %vm310, %v2173
        %2303 = vst.msk [vmem:[%s226 + $0x100] sm:$0xff] %vm310, %v2176
        %2304 = vst.msk [vmem:[%s226 + $0x108] sm:$0xff] %vm310, %v2179
        %2305 = vst.msk [vmem:[%s226 + $0x110] sm:$0xff] %vm310, %v2182
        %2306 = vst.msk [vmem:[%s226 + $0x118] sm:$0xff] %vm310, %v2185
        %2307 = vst.msk [vmem:[%s226 + $0x120] sm:$0xff] %vm310, %v2188
        %2308 = vst.msk [vmem:[%s226 + $0x128] sm:$0xff] %vm310, %v2191
        %2309 = vst.msk [vmem:[%s226 + $0x130] sm:$0xff] %vm310, %v2194
        %2310 = vst.msk [vmem:[%s226 + $0x138] sm:$0xff] %vm310, %v2197
        %2311 = vst.msk [vmem:[%s226 + $0x140] sm:$0xff] %vm310, %v2200
        %2312 = vst.msk [vmem:[%s226 + $0x148] sm:$0xff] %vm310, %v2203
        %2313 = vst.msk [vmem:[%s226 + $0x150] sm:$0xff] %vm310, %v2206
        %2314 = vst.msk [vmem:[%s226 + $0x158] sm:$0xff] %vm310, %v2209
        %2315 = vst.msk [vmem:[%s226 + $0x160] sm:$0xff] %vm310, %v2212
        %2316 = vst.msk [vmem:[%s226 + $0x168] sm:$0xff] %vm310, %v2215
        %2317 = vst.msk [vmem:[%s226 + $0x170] sm:$0xff] %vm310, %v2218
        %2318 = vst.msk [vmem:[%s226 + $0x178] sm:$0xff] %vm310, %v2221
        %2319 = vst.msk [vmem:[%s226 + $0x180] sm:$0xff] %vm310, %v2224
        %2320 = vst.msk [vmem:[%s226 + $0x188] sm:$0xff] %vm310, %v2227
        %2321 = vst.msk [vmem:[%s226 + $0x190] sm:$0xff] %vm310, %v2230
        %2322 = vst.msk [vmem:[%s226 + $0x198] sm:$0xff] %vm310, %v2233
        %2323 = vst.msk [vmem:[%s226 + $0x1a0] sm:$0xff] %vm310, %v2236
        %2324 = vst.msk [vmem:[%s226 + $0x1a8] sm:$0xff] %vm310, %v2239
        %2325 = vst.msk [vmem:[%s226 + $0x1b0] sm:$0xff] %vm310, %v2242
        %2326 = vst.msk [vmem:[%s226 + $0x1b8] sm:$0xff] %vm310, %v2245
        %2327 = vst.msk [vmem:[%s226 + $0x1c0] sm:$0xff] %vm310, %v2248
        %2328 = vst.msk [vmem:[%s226 + $0x1c8] sm:$0xff] %vm310, %v2251
        %2329 = vst.msk [vmem:[%s226 + $0x1d0] sm:$0xff] %vm310, %v2254
        %2330 = vst.msk [vmem:[%s226 + $0x1d8] sm:$0xff] %vm310, %v2257
        %2331 = vst.msk [vmem:[%s226 + $0x1e0] sm:$0xff] %vm310, %v2260
        %2332 = vst.msk [vmem:[%s226 + $0x1e8] sm:$0xff] %vm310, %v2263
        %2333 = vst.msk [vmem:[%s226 + $0x1f0] sm:$0xff] %vm310, %v2266
        %2334 = vst.msk [vmem:[%s226 + $0x1f8] sm:$0xff] %vm310, %v2269
        %s2335 = sand.u32 %s134, 1
        %s2336 = sand.u32 %s134, 1
        %s2337 = smul.addr %s2336, 512
        %s2338 = scalar_lea.vmem [#allocation2], %s2337
        // Predicated region
        $region41: #{tpu_custom_call.1} parent=39 // pred_check
          %p2339 = pneg %p144
        $region42: #{tpu_custom_call.1} parent=39 // pred_check_branch
          %2341 = sbr.rel (%p2339) target = $region44
        $region43: #{tpu_custom_call.1} parent=39 // pred_region
          %s2342 = smul.u32 64, %s16
          %s2343 = ssub.s32 84, %s2342
          %p2344 = scmp.lt.s32.totalorder %s2343, 64
          %s2345 = scalar_select %p2344, %s2343, 64
          %s2346 = smul.u32 8, %s2345
          %p2347 = scmp.ne.s32.totalorder 0, %s2346
          %s2348 = smul.addr %s2342, 8
          %s2349 = scalar_lea.vmem %s5, %s2348
          // Predicated region
          $region45: #{tpu_custom_call.1} parent=43 // pred_check
            %p2350 = pneg %p2347
          $region46: #{tpu_custom_call.1} parent=43 // pred_check_branch
            %2352 = sbr.rel (%p2350) target = $region48
          $region47: #{tpu_custom_call.1} parent=43 // pred_region
            // Predicated region
            $region49: #{tpu_custom_call.1} parent=47 // pred_check
              _
            $region50: #{tpu_custom_call.1} parent=47 // pred_check_branch
              %2354 = sbr.rel (0) target = $region52
            $region51: #{tpu_custom_call.1} parent=47 // pred_region
              // Predicated region
              $region71: #{tpu_custom_call.1} parent=51 // pred_check
                _
              $region72: #{tpu_custom_call.1} parent=51 // pred_check_branch
                %2466 = sbr.rel (0) target = $region74
              $region73: #{tpu_custom_call.1} parent=51 // pred_region
                %s2467 = sshrl.u32 %s2345, 5
                // While loop
                $region75: #{tpu_custom_call.1} parent=73 // loop_pre_header
                  _
                $region76: #{tpu_custom_call.1} parent=73 // loop_header
                  %s2469 = sphi 0, %s2471
                  %p2470 = scmp.ge.s32.totalorder %s2469, %s2467
                  %s2474 = sphi 0, %s2543
                  %s2475 = sphi %s2338, %s2546
                  %s2476 = sphi %s2349, %s2547
                $region77: #{tpu_custom_call.1} parent=73 // loop_header_branch
                  %2473 = sbr.rel (%p2470) target = $region81
                $region78: #{tpu_custom_call.1} parent=73 // loop_body
                  %v2477 = vld [vmem:[%s2475] sm:$0xff]
                  %2478 = vst [vmem:[%s2476] sm:$0xff] %v2477
                  %v2479 = vld [vmem:[%s2475 + $0x8] sm:$0xff]
                  %2480 = vst [vmem:[%s2476 + $0x8] sm:$0xff] %v2479
                  %v2481 = vld [vmem:[%s2475 + $0x10] sm:$0xff]
                  %2482 = vst [vmem:[%s2476 + $0x10] sm:$0xff] %v2481
                  %v2483 = vld [vmem:[%s2475 + $0x18] sm:$0xff]
                  %2484 = vst [vmem:[%s2476 + $0x18] sm:$0xff] %v2483
                  %v2485 = vld [vmem:[%s2475 + $0x20] sm:$0xff]
                  %2486 = vst [vmem:[%s2476 + $0x20] sm:$0xff] %v2485
                  %v2487 = vld [vmem:[%s2475 + $0x28] sm:$0xff]
                  %2488 = vst [vmem:[%s2476 + $0x28] sm:$0xff] %v2487
                  %v2489 = vld [vmem:[%s2475 + $0x30] sm:$0xff]
                  %2490 = vst [vmem:[%s2476 + $0x30] sm:$0xff] %v2489
                  %v2491 = vld [vmem:[%s2475 + $0x38] sm:$0xff]
                  %2492 = vst [vmem:[%s2476 + $0x38] sm:$0xff] %v2491
                  %v2493 = vld [vmem:[%s2475 + $0x40] sm:$0xff]
                  %2494 = vst [vmem:[%s2476 + $0x40] sm:$0xff] %v2493
                  %v2495 = vld [vmem:[%s2475 + $0x48] sm:$0xff]
                  %2496 = vst [vmem:[%s2476 + $0x48] sm:$0xff] %v2495
                  %v2497 = vld [vmem:[%s2475 + $0x50] sm:$0xff]
                  %2498 = vst [vmem:[%s2476 + $0x50] sm:$0xff] %v2497
                  %v2499 = vld [vmem:[%s2475 + $0x58] sm:$0xff]
                  %2500 = vst [vmem:[%s2476 + $0x58] sm:$0xff] %v2499
                  %v2501 = vld [vmem:[%s2475 + $0x60] sm:$0xff]
                  %2502 = vst [vmem:[%s2476 + $0x60] sm:$0xff] %v2501
                  %v2503 = vld [vmem:[%s2475 + $0x68] sm:$0xff]
                  %2504 = vst [vmem:[%s2476 + $0x68] sm:$0xff] %v2503
                  %v2505 = vld [vmem:[%s2475 + $0x70] sm:$0xff]
                  %2506 = vst [vmem:[%s2476 + $0x70] sm:$0xff] %v2505
                  %v2507 = vld [vmem:[%s2475 + $0x78] sm:$0xff]
                  %2508 = vst [vmem:[%s2476 + $0x78] sm:$0xff] %v2507
                  %v2509 = vld [vmem:[%s2475 + $0x80] sm:$0xff]
                  %2510 = vst [vmem:[%s2476 + $0x80] sm:$0xff] %v2509
                  %v2511 = vld [vmem:[%s2475 + $0x88] sm:$0xff]
                  %2512 = vst [vmem:[%s2476 + $0x88] sm:$0xff] %v2511
                  %v2513 = vld [vmem:[%s2475 + $0x90] sm:$0xff]
                  %2514 = vst [vmem:[%s2476 + $0x90] sm:$0xff] %v2513
                  %v2515 = vld [vmem:[%s2475 + $0x98] sm:$0xff]
                  %2516 = vst [vmem:[%s2476 + $0x98] sm:$0xff] %v2515
                  %v2517 = vld [vmem:[%s2475 + $0xa0] sm:$0xff]
                  %2518 = vst [vmem:[%s2476 + $0xa0] sm:$0xff] %v2517
                  %v2519 = vld [vmem:[%s2475 + $0xa8] sm:$0xff]
                  %2520 = vst [vmem:[%s2476 + $0xa8] sm:$0xff] %v2519
                  %v2521 = vld [vmem:[%s2475 + $0xb0] sm:$0xff]
                  %2522 = vst [vmem:[%s2476 + $0xb0] sm:$0xff] %v2521
                  %v2523 = vld [vmem:[%s2475 + $0xb8] sm:$0xff]
                  %2524 = vst [vmem:[%s2476 + $0xb8] sm:$0xff] %v2523
                  %v2525 = vld [vmem:[%s2475 + $0xc0] sm:$0xff]
                  %2526 = vst [vmem:[%s2476 + $0xc0] sm:$0xff] %v2525
                  %v2527 = vld [vmem:[%s2475 + $0xc8] sm:$0xff]
                  %2528 = vst [vmem:[%s2476 + $0xc8] sm:$0xff] %v2527
                  %v2529 = vld [vmem:[%s2475 + $0xd0] sm:$0xff]
                  %2530 = vst [vmem:[%s2476 + $0xd0] sm:$0xff] %v2529
                  %v2531 = vld [vmem:[%s2475 + $0xd8] sm:$0xff]
                  %2532 = vst [vmem:[%s2476 + $0xd8] sm:$0xff] %v2531
                  %v2533 = vld [vmem:[%s2475 + $0xe0] sm:$0xff]
                  %2534 = vst [vmem:[%s2476 + $0xe0] sm:$0xff] %v2533
                  %v2535 = vld [vmem:[%s2475 + $0xe8] sm:$0xff]
                  %2536 = vst [vmem:[%s2476 + $0xe8] sm:$0xff] %v2535
                  %v2537 = vld [vmem:[%s2475 + $0xf0] sm:$0xff]
                  %2538 = vst [vmem:[%s2476 + $0xf0] sm:$0xff] %v2537
                  %v2539 = vld [vmem:[%s2475 + $0xf8] sm:$0xff]
                  %2540 = vst [vmem:[%s2476 + $0xf8] sm:$0xff] %v2539
                  %s2541 = sadd.s32 1, %s2474
                  %p2542 = scmp.ge.s32.totalorder %s2541, %s2467
                  %s2543 = scalar_select %p2542, 0, %s2541
                  %s2544 = smul.u32 %s2543, 256
                  %s2545 = smul.u32 %s2543, 256
                  %s2546 = scalar_lea.vmem %s2338, %s2544 [#allocation2]
                  %s2547 = scalar_lea.vmem %s2349, %s2545
                $region79: #{tpu_custom_call.1} parent=73 // loop_footer
                  %s2471 = sadd.s32 %s2469, 1
                $region80: #{tpu_custom_call.1} parent=73 // loop_footer_branch
                  %2468 = sbr.rel target = $region76
                $region81: #{tpu_custom_call.1} parent=73 // loop_exit
                  _
                %s2548 = sshrl.u32 %s2345, 5
                %s2549 = sand.u32 %s2345, 31
                %s2550 = smul.u32 %s2548, 32
                %s2551 = smul.u32 8, %s2550
                %s2552 = scalar_lea.vmem %s2338, %s2551 [#allocation2]
                %s2553 = smul.u32 8, %s2550
                %s2554 = scalar_lea.vmem %s2349, %s2553
                // While loop
                $region82: #{tpu_custom_call.1} parent=73 // loop_pre_header
                  _
                $region83: #{tpu_custom_call.1} parent=73 // loop_header
                  %s2556 = sphi 0, %s2558
                  %p2557 = scmp.ge.s32.totalorder %s2556, %s2549
                  %s2561 = sphi 0, %s2568
                  %s2562 = sphi %s2552, %s2571
                  %s2563 = sphi %s2554, %s2572
                $region84: #{tpu_custom_call.1} parent=73 // loop_header_branch
                  %2560 = sbr.rel (%p2557) target = $region88
                $region85: #{tpu_custom_call.1} parent=73 // loop_body
                  %v2564 = vld [vmem:[%s2562] sm:$0xff]
                  %2565 = vst [vmem:[%s2563] sm:$0xff] %v2564
                  %s2566 = sadd.s32 1, %s2561
                  %p2567 = scmp.ge.s32.totalorder %s2566, %s2549
                  %s2568 = scalar_select %p2567, 0, %s2566
                  %s2569 = smul.u32 %s2568, 8
                  %s2570 = smul.u32 %s2568, 8
                  %s2571 = scalar_lea.vmem %s2552, %s2569 [#allocation2]
                  %s2572 = scalar_lea.vmem %s2554, %s2570
                $region86: #{tpu_custom_call.1} parent=73 // loop_footer
                  %s2558 = sadd.s32 %s2556, 1
                $region87: #{tpu_custom_call.1} parent=73 // loop_footer_branch
                  %2555 = sbr.rel target = $region83
                $region88: #{tpu_custom_call.1} parent=73 // loop_exit
                  _
              $region74: #{tpu_custom_call.1} parent=51 // pred_fallthru
                _
              // Predicated region
              $region89: #{tpu_custom_call.1} parent=51 // pred_check
                _
              $region90: #{tpu_custom_call.1} parent=51 // pred_check_branch
                %2574 = sbr.rel target = $region92
              $region91: #{tpu_custom_call.1} parent=51 // pred_region
                _
              $region92: #{tpu_custom_call.1} parent=51 // pred_fallthru
                _
            $region52: #{tpu_custom_call.1} parent=47 // pred_fallthru
              _
            // Predicated region
            $region53: #{tpu_custom_call.1} parent=47 // pred_check
              _
            $region54: #{tpu_custom_call.1} parent=47 // pred_check_branch
              %2356 = sbr.rel target = $region56
            $region55: #{tpu_custom_call.1} parent=47 // pred_region
              %s2358 = ssub.s32 256, 1
              %s2359 = sshrl.u32 %s2345, 5
              // While loop
              $region57: #{tpu_custom_call.1} parent=55 // loop_pre_header
                _
              $region58: #{tpu_custom_call.1} parent=55 // loop_header
                %s2361 = sphi 0, %s2363
                %p2362 = scmp.ge.s32.totalorder %s2361, %s2359
                %s2366 = sphi 0, %s2435
                %s2367 = sphi %s2338, %s2438
                %s2368 = sphi %s2349, %s2439
              $region59: #{tpu_custom_call.1} parent=55 // loop_header_branch
                %2365 = sbr.rel (%p2362) target = $region63
              $region60: #{tpu_custom_call.1} parent=55 // loop_body
                %v2369 = vld [vmem:[%s2367] sm:%s2358]
                %2370 = vst [vmem:[%s2368] sm:%s2358] %v2369
                %v2371 = vld [vmem:[%s2367 + $0x8] sm:%s2358]
                %2372 = vst [vmem:[%s2368 + $0x8] sm:%s2358] %v2371
                %v2373 = vld [vmem:[%s2367 + $0x10] sm:%s2358]
                %2374 = vst [vmem:[%s2368 + $0x10] sm:%s2358] %v2373
                %v2375 = vld [vmem:[%s2367 + $0x18] sm:%s2358]
                %2376 = vst [vmem:[%s2368 + $0x18] sm:%s2358] %v2375
                %v2377 = vld [vmem:[%s2367 + $0x20] sm:%s2358]
                %2378 = vst [vmem:[%s2368 + $0x20] sm:%s2358] %v2377
                %v2379 = vld [vmem:[%s2367 + $0x28] sm:%s2358]
                %2380 = vst [vmem:[%s2368 + $0x28] sm:%s2358] %v2379
                %v2381 = vld [vmem:[%s2367 + $0x30] sm:%s2358]
                %2382 = vst [vmem:[%s2368 + $0x30] sm:%s2358] %v2381
                %v2383 = vld [vmem:[%s2367 + $0x38] sm:%s2358]
                %2384 = vst [vmem:[%s2368 + $0x38] sm:%s2358] %v2383
                %v2385 = vld [vmem:[%s2367 + $0x40] sm:%s2358]
                %2386 = vst [vmem:[%s2368 + $0x40] sm:%s2358] %v2385
                %v2387 = vld [vmem:[%s2367 + $0x48] sm:%s2358]
                %2388 = vst [vmem:[%s2368 + $0x48] sm:%s2358] %v2387
                %v2389 = vld [vmem:[%s2367 + $0x50] sm:%s2358]
                %2390 = vst [vmem:[%s2368 + $0x50] sm:%s2358] %v2389
                %v2391 = vld [vmem:[%s2367 + $0x58] sm:%s2358]
                %2392 = vst [vmem:[%s2368 + $0x58] sm:%s2358] %v2391
                %v2393 = vld [vmem:[%s2367 + $0x60] sm:%s2358]
                %2394 = vst [vmem:[%s2368 + $0x60] sm:%s2358] %v2393
                %v2395 = vld [vmem:[%s2367 + $0x68] sm:%s2358]
                %2396 = vst [vmem:[%s2368 + $0x68] sm:%s2358] %v2395
                %v2397 = vld [vmem:[%s2367 + $0x70] sm:%s2358]
                %2398 = vst [vmem:[%s2368 + $0x70] sm:%s2358] %v2397
                %v2399 = vld [vmem:[%s2367 + $0x78] sm:%s2358]
                %2400 = vst [vmem:[%s2368 + $0x78] sm:%s2358] %v2399
                %v2401 = vld [vmem:[%s2367 + $0x80] sm:%s2358]
                %2402 = vst [vmem:[%s2368 + $0x80] sm:%s2358] %v2401
                %v2403 = vld [vmem:[%s2367 + $0x88] sm:%s2358]
                %2404 = vst [vmem:[%s2368 + $0x88] sm:%s2358] %v2403
                %v2405 = vld [vmem:[%s2367 + $0x90] sm:%s2358]
                %2406 = vst [vmem:[%s2368 + $0x90] sm:%s2358] %v2405
                %v2407 = vld [vmem:[%s2367 + $0x98] sm:%s2358]
                %2408 = vst [vmem:[%s2368 + $0x98] sm:%s2358] %v2407
                %v2409 = vld [vmem:[%s2367 + $0xa0] sm:%s2358]
                %2410 = vst [vmem:[%s2368 + $0xa0] sm:%s2358] %v2409
                %v2411 = vld [vmem:[%s2367 + $0xa8] sm:%s2358]
                %2412 = vst [vmem:[%s2368 + $0xa8] sm:%s2358] %v2411
                %v2413 = vld [vmem:[%s2367 + $0xb0] sm:%s2358]
                %2414 = vst [vmem:[%s2368 + $0xb0] sm:%s2358] %v2413
                %v2415 = vld [vmem:[%s2367 + $0xb8] sm:%s2358]
                %2416 = vst [vmem:[%s2368 + $0xb8] sm:%s2358] %v2415
                %v2417 = vld [vmem:[%s2367 + $0xc0] sm:%s2358]
                %2418 = vst [vmem:[%s2368 + $0xc0] sm:%s2358] %v2417
                %v2419 = vld [vmem:[%s2367 + $0xc8] sm:%s2358]
                %2420 = vst [vmem:[%s2368 + $0xc8] sm:%s2358] %v2419
                %v2421 = vld [vmem:[%s2367 + $0xd0] sm:%s2358]
                %2422 = vst [vmem:[%s2368 + $0xd0] sm:%s2358] %v2421
                %v2423 = vld [vmem:[%s2367 + $0xd8] sm:%s2358]
                %2424 = vst [vmem:[%s2368 + $0xd8] sm:%s2358] %v2423
                %v2425 = vld [vmem:[%s2367 + $0xe0] sm:%s2358]
                %2426 = vst [vmem:[%s2368 + $0xe0] sm:%s2358] %v2425
                %v2427 = vld [vmem:[%s2367 + $0xe8] sm:%s2358]
                %2428 = vst [vmem:[%s2368 + $0xe8] sm:%s2358] %v2427
                %v2429 = vld [vmem:[%s2367 + $0xf0] sm:%s2358]
                %2430 = vst [vmem:[%s2368 + $0xf0] sm:%s2358] %v2429
                %v2431 = vld [vmem:[%s2367 + $0xf8] sm:%s2358]
                %2432 = vst [vmem:[%s2368 + $0xf8] sm:%s2358] %v2431
                %s2433 = sadd.s32 1, %s2366
                %p2434 = scmp.ge.s32.totalorder %s2433, %s2359
                %s2435 = scalar_select %p2434, 0, %s2433
                %s2436 = smul.u32 %s2435, 256
                %s2437 = smul.u32 %s2435, 256
                %s2438 = scalar_lea.vmem %s2338, %s2436 [#allocation2]
                %s2439 = scalar_lea.vmem %s2349, %s2437
              $region61: #{tpu_custom_call.1} parent=55 // loop_footer
                %s2363 = sadd.s32 %s2361, 1
              $region62: #{tpu_custom_call.1} parent=55 // loop_footer_branch
                %2360 = sbr.rel target = $region58
              $region63: #{tpu_custom_call.1} parent=55 // loop_exit
                _
              %s2440 = sshrl.u32 %s2345, 5
              %s2441 = sand.u32 %s2345, 31
              %s2442 = smul.u32 %s2440, 32
              %s2443 = smul.u32 8, %s2442
              %s2444 = scalar_lea.vmem %s2338, %s2443 [#allocation2]
              %s2445 = smul.u32 8, %s2442
              %s2446 = scalar_lea.vmem %s2349, %s2445
              // While loop
              $region64: #{tpu_custom_call.1} parent=55 // loop_pre_header
                _
              $region65: #{tpu_custom_call.1} parent=55 // loop_header
                %s2448 = sphi 0, %s2450
                %p2449 = scmp.ge.s32.totalorder %s2448, %s2441
                %s2453 = sphi 0, %s2460
                %s2454 = sphi %s2444, %s2463
                %s2455 = sphi %s2446, %s2464
              $region66: #{tpu_custom_call.1} parent=55 // loop_header_branch
                %2452 = sbr.rel (%p2449) target = $region70
              $region67: #{tpu_custom_call.1} parent=55 // loop_body
                %v2456 = vld [vmem:[%s2454] sm:%s2358]
                %2457 = vst [vmem:[%s2455] sm:%s2358] %v2456
                %s2458 = sadd.s32 1, %s2453
                %p2459 = scmp.ge.s32.totalorder %s2458, %s2441
                %s2460 = scalar_select %p2459, 0, %s2458
                %s2461 = smul.u32 %s2460, 8
                %s2462 = smul.u32 %s2460, 8
                %s2463 = scalar_lea.vmem %s2444, %s2461 [#allocation2]
                %s2464 = scalar_lea.vmem %s2446, %s2462
              $region68: #{tpu_custom_call.1} parent=55 // loop_footer
                %s2450 = sadd.s32 %s2448, 1
              $region69: #{tpu_custom_call.1} parent=55 // loop_footer_branch
                %2447 = sbr.rel target = $region65
              $region70: #{tpu_custom_call.1} parent=55 // loop_exit
                _
            $region56: #{tpu_custom_call.1} parent=47 // pred_fallthru
              _
          $region48: #{tpu_custom_call.1} parent=43 // pred_fallthru
            _
          %2575 = vnop
        $region44: #{tpu_custom_call.1} parent=39 // pred_fallthru
          _
      $region40: #{tpu_custom_call.1} parent=5 // pred_fallthru
        _
      %p2576 = scmp.le.s32.totalorder 2, %s11
      // Predicated region
      $region93: #{tpu_custom_call.1} parent=5 // pred_check
        %p2577 = pneg %p2576
      $region94: #{tpu_custom_call.1} parent=5 // pred_check_branch
        %2579 = sbr.rel (%p2577) target = $region96
      $region95: #{tpu_custom_call.1} parent=5 // pred_region
        %s2580 = ssub.s32 %s11, 2
        // Predicated region
        $region97: #{tpu_custom_call.1} parent=95 // pred_check
          %p2581 = pneg %p150
        $region98: #{tpu_custom_call.1} parent=95 // pred_check_branch
          %2583 = sbr.rel (%p2581) target = $region100
        $region99: #{tpu_custom_call.1} parent=95 // pred_region
          %s2584 = sand.u32 %s135, 1
          %s2585 = sand.u32 %s135, 1
          %s2586 = smul.addr %s2585, 512
          %s2587 = scalar_lea.vmem [#allocation2], %s2586
        $region100: #{tpu_custom_call.1} parent=95 // pred_fallthru
          _
      $region96: #{tpu_custom_call.1} parent=5 // pred_fallthru
        _
    $region6: #{tpu_custom_call.1} parent=1 // loop_footer
      %s15 = sadd.s32 1, %s11
    $region7: #{tpu_custom_call.1} parent=1 // loop_footer_branch
      %10 = sbr.rel target = $region3
    $region8: #{tpu_custom_call.1} parent=1 // loop_exit
      _

</llo_original>
